<compile_context>
chip_gen: v7x
topology: tpu7x:2x2x1
jax: 0.10.0
libtpu: 0.0.40
codegen_flags: <defaults>
</compile_context>

<pallas_src>
import jax
import jax.numpy as jnp
from jax.experimental import pallas as pl
from jax.experimental.pallas import tpu as pltpu


def _round_up(n, m):
    return ((n + m - 1) // m) * m


def _softplus(x):
    # numerically stable softplus: max(x,0) + log1p(exp(-|x|))
    return jnp.maximum(x, 0.0) + jnp.log1p(jnp.exp(-jnp.abs(x)))


def _make_kernel(hidden_dim, latent_dim, d_pad, ml_pad, offsets):
    OFF_E1, OFF_E2, OFF_ML, OFF_D1, OFF_D2, OFF_D3 = offsets
    h, L = hidden_dim, latent_dim

    def kernel(x_ref, eps_ref,
               we1_ref, we2_ref, wml_ref, wd1_ref, wd2_ref, wd3_ref,
               bias_ref,
               xout_ref, ml_ref):
        # unpack lane-aligned bias slab (static, 128-aligned slices, f32)
        b_e1 = bias_ref[:, OFF_E1:OFF_E1 + h]
        b_e2 = bias_ref[:, OFF_E2:OFF_E2 + h]
        b_ml = bias_ref[:, OFF_ML:OFF_ML + ml_pad]
        b_d1 = bias_ref[:, OFF_D1:OFF_D1 + h]
        b_d2 = bias_ref[:, OFF_D2:OFF_D2 + h]
        b_d3 = bias_ref[:, OFF_D3:OFF_D3 + d_pad]

        x = x_ref[...]  # f32 [tb, input_dim]

        # ---- encoder (bf16 MXU inputs, f32 accumulate + f32 elementwise) ----
        a = jnp.dot(x.astype(jnp.bfloat16), we1_ref[...],
                    preferred_element_type=jnp.float32) + b_e1
        a = jnp.maximum(a, 0.0)
        a = jnp.dot(a.astype(jnp.bfloat16), we2_ref[...],
                    preferred_element_type=jnp.float32) + b_e2
        a = jnp.maximum(a, 0.0)

        # ---- fused mean / logvar projection: one [hidden, ml_pad] matmul ----
        ml = jnp.dot(a.astype(jnp.bfloat16), wml_ref[...],
                     preferred_element_type=jnp.float32) + b_ml
        lane = jax.lax.broadcasted_iota(jnp.int32, ml.shape, dimension=1)
        # lanes [0,L) = mean (identity), lanes [L,...) = softplus(logvar) (padding
        # lanes >= 2L are garbage and sliced off in the wrapper).
        ml_act = jnp.where(lane < L, ml, _softplus(ml))
        ml_ref[...] = ml_act                       # lane-dense [tb, ml_pad] store

        mean = ml_act[:, :L]
        logvar = ml_act[:, L:2 * L]

        # ---- reparameterization: z = eps * exp(0.5*logvar) + mean ----
        z = eps_ref[...] * jnp.exp(0.5 * logvar) + mean

        # ---- decoder ----
        d = jnp.dot(z.astype(jnp.bfloat16), wd1_ref[...],
                    preferred_element_type=jnp.float32) + b_d1
        d = jnp.maximum(d, 0.0)
        d = jnp.dot(d.astype(jnp.bfloat16), wd2_ref[...],
                    preferred_element_type=jnp.float32) + b_d2
        d = jnp.maximum(d, 0.0)
        logits = jnp.dot(d.astype(jnp.bfloat16), wd3_ref[...],
                         preferred_element_type=jnp.float32) + b_d3
        xout_ref[...] = jax.nn.sigmoid(logits)     # lane-dense [tb, d_pad] store

    return kernel


def vae_forward(x, params, eps, *, block_rows=512):
    """x: [B, input_dim] f32, eps: [B, latent_dim] f32.
    Returns (x_out [B, input_dim], z_mean [B, latent], z_logvar [B, latent])."""
    B, input_dim = x.shape
    hidden_dim = params["w_e1"].shape[1]
    latent_dim = params["w_mean"].shape[1]
    d_pad = _round_up(input_dim, 128)          # lane-dense decoder output width
    ml_pad = _round_up(2 * latent_dim, 128)    # lane-dense [mean|logvar] width

    # ---- pack weights (bf16) ----
    we1 = params["w_e1"].astype(jnp.bfloat16)
    we2 = params["w_e2"].astype(jnp.bfloat16)
    wml = jnp.pad(jnp.concatenate([params["w_mean"], params["w_logvar"]], axis=1),
                  ((0, 0), (0, ml_pad - 2 * latent_dim))).astype(jnp.bfloat16)
    wd1 = params["w_d1"].astype(jnp.bfloat16)
    wd2 = params["w_d2"].astype(jnp.bfloat16)
    wd3 = jnp.pad(params["w_d3"],
                  ((0, 0), (0, d_pad - input_dim))).astype(jnp.bfloat16)  # [h, d_pad]

    # ---- pack all biases into one lane-aligned f32 slab ----
    seg_h = _round_up(hidden_dim, 128)
    OFF_E1 = 0
    OFF_E2 = OFF_E1 + seg_h
    OFF_ML = OFF_E2 + seg_h
    OFF_D1 = OFF_ML + ml_pad
    OFF_D2 = OFF_D1 + seg_h
    OFF_D3 = OFF_D2 + seg_h
    total = OFF_D3 + d_pad

    def _seg(b, width):
        b = b.astype(jnp.float32)
        return jnp.pad(b, ((0, 0), (0, width - b.shape[1])))

    b_ml = jnp.concatenate([params["b_mean"], params["b_logvar"]], axis=1)
    bias_pack = jnp.concatenate(
        [_seg(params["b_e1"], seg_h), _seg(params["b_e2"], seg_h),
         _seg(b_ml, ml_pad), _seg(params["b_d1"], seg_h),
         _seg(params["b_d2"], seg_h), _seg(params["b_d3"], d_pad)], axis=1)
    assert bias_pack.shape == (1, total)

    # ---- batch tiling (grid over rows, padded to a multiple of the tile) ----
    tb = min(block_rows, _round_up(B, 8))
    Bp = _round_up(B, tb)
    if Bp != B:
        x = jnp.pad(x, ((0, Bp - B), (0, 0)))
        eps = jnp.pad(eps, ((0, Bp - B), (0, 0)))
    grid = (Bp // tb,)

    def full_spec(shape):
        return pl.BlockSpec(shape, lambda i: (0, 0))   # VMEM-resident across grid

    def row_spec(width):
        return pl.BlockSpec((tb, width), lambda i: (i, 0))

    kernel = _make_kernel(hidden_dim, latent_dim, d_pad, ml_pad,
                          (OFF_E1, OFF_E2, OFF_ML, OFF_D1, OFF_D2, OFF_D3))

    x_out_p, ml = pl.pallas_call(
        kernel,
        out_shape=(
            jax.ShapeDtypeStruct((Bp, d_pad), jnp.float32),    # padded x_out
            jax.ShapeDtypeStruct((Bp, ml_pad), jnp.float32),   # padded [mean|logvar]
        ),
        grid=grid,
        in_specs=[
            row_spec(input_dim),            # x
            row_spec(latent_dim),           # eps
            full_spec(we1.shape), full_spec(we2.shape), full_spec(wml.shape),
            full_spec(wd1.shape), full_spec(wd2.shape), full_spec(wd3.shape),
            full_spec(bias_pack.shape),
        ],
        out_specs=(row_spec(d_pad), row_spec(ml_pad)),
        compiler_params=pltpu.CompilerParams(
            dimension_semantics=("parallel",)),   # megacore split on v7x
    )(x, eps, we1, we2, wml, wd1, wd2, wd3, bias_pack)

    x_out = x_out_p[:B, :input_dim]
    z_mean = ml[:B, :latent_dim]
    z_logvar = ml[:B, latent_dim:2 * latent_dim]
    return x_out, z_mean, z_logvar


def vae_reference(x, params, eps):
    """Pure-JAX f32 reference of the PyTorch forward (for a sanity check)."""
    relu = lambda v: jnp.maximum(v, 0.0)
    h = relu(x @ params["w_e1"] + params["b_e1"])
    h = relu(h @ params["w_e2"] + params["b_e2"])
    mean = h @ params["w_mean"] + params["b_mean"]
    logvar = jax.nn.softplus(h @ params["w_logvar"] + params["b_logvar"])
    z = eps * jnp.exp(0.5 * logvar) + mean
    d = relu(z @ params["w_d1"] + params["b_d1"])
    d = relu(d @ params["w_d2"] + params["b_d2"])
    x_out = jax.nn.sigmoid(d @ params["w_d3"] + params["b_d3"])
    return x_out, mean, logvar


def init_params(key, input_dim, hidden_dim, latent_dim):
    """Mimics PyTorch nn.Linear default init (uniform +/- 1/sqrt(fan_in)).
    Weights stored pre-transposed as [in_features, out_features]."""
    def linear(k, fan_in, fan_out):
        kw, kb = jax.random.split(k)
        bound = 1.0 / jnp.sqrt(fan_in)
        w = jax.random.uniform(kw, (fan_in, fan_out), jnp.float32, -bound, bound)
        b = jax.random.uniform(kb, (1, fan_out), jnp.float32, -bound, bound)
        return w, b

    keys = jax.random.split(key, 7)
    p = {}
    p["w_e1"], p["b_e1"] = linear(keys[0], input_dim, hidden_dim)
    p["w_e2"], p["b_e2"] = linear(keys[1], hidden_dim, hidden_dim)
    p["w_mean"], p["b_mean"] = linear(keys[2], hidden_dim, latent_dim)
    p["w_logvar"], p["b_logvar"] = linear(keys[3], hidden_dim, latent_dim)
    p["w_d1"], p["b_d1"] = linear(keys[4], latent_dim, hidden_dim)
    p["w_d2"], p["b_d2"] = linear(keys[5], hidden_dim, hidden_dim)
    p["w_d3"], p["b_d3"] = linear(keys[6], hidden_dim, input_dim)
    return p


if __name__ == "__main__":
    # Module defaults: input_dim=784, hidden_dim=64, latent_dim=32; small batch.
    B, input_dim, hidden_dim, latent_dim = 16, 784, 64, 32

    key = jax.random.PRNGKey(0)
    k_x, k_p, k_eps = jax.random.split(key, 3)

    x = jax.random.normal(k_x, (B, input_dim), jnp.float32)
    params = init_params(k_p, input_dim, hidden_dim, latent_dim)
    eps = jax.random.normal(k_eps, (B, latent_dim), jnp.float32)

    x_out, z_mean, z_logvar = vae_forward(x, params, eps)
    jax.block_until_ready((x_out, z_mean, z_logvar))

    assert x_out.shape == (B, input_dim)
    assert z_mean.shape == (B, latent_dim)
    assert z_logvar.shape == (B, latent_dim)

    # Sanity-check against the pure-JAX f32 reference (loose tol: bf16 weights on MXU).
    r_x, r_m, r_lv = vae_reference(x, params, eps)
    assert float(jnp.max(jnp.abs(x_out - r_x))) < 5e-2
    assert float(jnp.max(jnp.abs(z_mean - r_m))) < 1e-1
    assert float(jnp.max(jnp.abs(z_logvar - r_lv))) < 1e-1

    print("KERNEL_OK")
</pallas_src>

<mosaic_0001>
module attributes {stable_mosaic.version = 11 : i64} {
  func.func @kernel(%arg0: i32, %arg1: memref<16x784xf32, #tpu.memory_space<vmem>>, %arg2: memref<16x32xf32, #tpu.memory_space<vmem>>, %arg3: memref<784x64xbf16, #tpu.memory_space<vmem>>, %arg4: memref<64x64xbf16, #tpu.memory_space<vmem>>, %arg5: memref<64x128xbf16, #tpu.memory_space<vmem>>, %arg6: memref<32x64xbf16, #tpu.memory_space<vmem>>, %arg7: memref<64x64xbf16, #tpu.memory_space<vmem>>, %arg8: memref<64x896xbf16, #tpu.memory_space<vmem>>, %arg9: memref<1x1536xf32, #tpu.memory_space<vmem>>, %arg10: memref<16x896xf32, #tpu.memory_space<vmem>>, %arg11: memref<16x128xf32, #tpu.memory_space<vmem>>) attributes {dimension_semantics = [#tpu.dimension_semantics<parallel>], iteration_bounds = array<i64: 1>, scalar_prefetch = 0 : i64, scratch_operands = 0 : i64, tpu.core_type = #tpu.core_type<tc>, window_params = [{transform_indices = @transform_0, window_bounds = array<i64: 16, 784>}, {transform_indices = @transform_1, window_bounds = array<i64: 16, 32>}, {pipeline_mode = #tpu.pipeline_mode<synchronous>, transform_indices = @transform_2, window_bounds = array<i64: 784, 64>}, {pipeline_mode = #tpu.pipeline_mode<synchronous>, transform_indices = @transform_3, window_bounds = array<i64: 64, 64>}, {pipeline_mode = #tpu.pipeline_mode<synchronous>, transform_indices = @transform_4, window_bounds = array<i64: 64, 128>}, {pipeline_mode = #tpu.pipeline_mode<synchronous>, transform_indices = @transform_5, window_bounds = array<i64: 32, 64>}, {pipeline_mode = #tpu.pipeline_mode<synchronous>, transform_indices = @transform_6, window_bounds = array<i64: 64, 64>}, {pipeline_mode = #tpu.pipeline_mode<synchronous>, transform_indices = @transform_7, window_bounds = array<i64: 64, 896>}, {pipeline_mode = #tpu.pipeline_mode<synchronous>, transform_indices = @transform_8, window_bounds = array<i64: 1, 1536>}, {transform_indices = @transform_9, window_bounds = array<i64: 16, 896>}, {transform_indices = @transform_10, window_bounds = array<i64: 16, 128>}]} {
    %c0 = arith.constant 0 : index
    %c0_0 = arith.constant 0 : index
    %0 = vector.load %arg9[%c0, %c0_0] : memref<1x1536xf32, #tpu.memory_space<vmem>>, vector<1x64xf32>
    %c0_1 = arith.constant 0 : index
    %c128 = arith.constant 128 : index
    %1 = vector.load %arg9[%c0_1, %c128] : memref<1x1536xf32, #tpu.memory_space<vmem>>, vector<1x64xf32>
    %c0_2 = arith.constant 0 : index
    %c256 = arith.constant 256 : index
    %2 = vector.load %arg9[%c0_2, %c256] : memref<1x1536xf32, #tpu.memory_space<vmem>>, vector<1x128xf32>
    %c0_3 = arith.constant 0 : index
    %c384 = arith.constant 384 : index
    %3 = vector.load %arg9[%c0_3, %c384] : memref<1x1536xf32, #tpu.memory_space<vmem>>, vector<1x64xf32>
    %c0_4 = arith.constant 0 : index
    %c512 = arith.constant 512 : index
    %4 = vector.load %arg9[%c0_4, %c512] : memref<1x1536xf32, #tpu.memory_space<vmem>>, vector<1x64xf32>
    %c0_5 = arith.constant 0 : index
    %c640 = arith.constant 640 : index
    %5 = vector.load %arg9[%c0_5, %c640] : memref<1x1536xf32, #tpu.memory_space<vmem>>, vector<1x896xf32>
    %c0_6 = arith.constant 0 : index
    %c0_7 = arith.constant 0 : index
    %6 = vector.load %arg1[%c0_6, %c0_7] : memref<16x784xf32, #tpu.memory_space<vmem>>, vector<16x784xf32>
    %7 = arith.truncf %6 : vector<16x784xf32> to vector<16x784xbf16>
    %c0_8 = arith.constant 0 : index
    %c0_9 = arith.constant 0 : index
    %8 = vector.load %arg3[%c0_8, %c0_9] : memref<784x64xbf16, #tpu.memory_space<vmem>>, vector<784x64xbf16>
    %cst = arith.constant dense<0.000000e+00> : vector<16x64xf32>
    %9 = tpu.matmul %7, %8, %cst {dimension_numbers = #tpu.dot_dimension_numbers<[1], [0], [0], [1], [0, 0, 1, 1], [], []>} : vector<16x784xbf16>, vector<784x64xbf16>, vector<16x64xf32> -> vector<16x64xf32>
    %10 = vector.broadcast %0 : vector<1x64xf32> to vector<16x64xf32>
    %11 = arith.addf %9, %10 : vector<16x64xf32>
    %cst_10 = arith.constant 0.000000e+00 : f32
    %12 = vector.broadcast %cst_10 : f32 to vector<16x64xf32>
    %13 = arith.maximumf %11, %12 : vector<16x64xf32>
    %14 = arith.truncf %13 : vector<16x64xf32> to vector<16x64xbf16>
    %c0_11 = arith.constant 0 : index
    %c0_12 = arith.constant 0 : index
    %15 = vector.load %arg4[%c0_11, %c0_12] : memref<64x64xbf16, #tpu.memory_space<vmem>>, vector<64x64xbf16>
    %cst_13 = arith.constant dense<0.000000e+00> : vector<16x64xf32>
    %16 = tpu.matmul %14, %15, %cst_13 {dimension_numbers = #tpu.dot_dimension_numbers<[1], [0], [0], [1], [0, 0, 1, 1], [], []>} : vector<16x64xbf16>, vector<64x64xbf16>, vector<16x64xf32> -> vector<16x64xf32>
    %17 = vector.broadcast %1 : vector<1x64xf32> to vector<16x64xf32>
    %18 = arith.addf %16, %17 : vector<16x64xf32>
    %cst_14 = arith.constant 0.000000e+00 : f32
    %19 = vector.broadcast %cst_14 : f32 to vector<16x64xf32>
    %20 = arith.maximumf %18, %19 : vector<16x64xf32>
    %21 = arith.truncf %20 : vector<16x64xf32> to vector<16x64xbf16>
    %c0_15 = arith.constant 0 : index
    %c0_16 = arith.constant 0 : index
    %22 = vector.load %arg5[%c0_15, %c0_16] : memref<64x128xbf16, #tpu.memory_space<vmem>>, vector<64x128xbf16>
    %cst_17 = arith.constant dense<0.000000e+00> : vector<16x128xf32>
    %23 = tpu.matmul %21, %22, %cst_17 {dimension_numbers = #tpu.dot_dimension_numbers<[1], [0], [0], [1], [0, 0, 1, 1], [], []>} : vector<16x64xbf16>, vector<64x128xbf16>, vector<16x128xf32> -> vector<16x128xf32>
    %24 = vector.broadcast %2 : vector<1x128xf32> to vector<16x128xf32>
    %25 = arith.addf %23, %24 : vector<16x128xf32>
    %26 = tpu.iota {dimensions = array<i32: 1>} : vector<16x128xi32>
    %c32_i32 = arith.constant 32 : i32
    %27 = vector.broadcast %c32_i32 : i32 to vector<16x128xi32>
    %28 = arith.cmpi slt, %26, %27 : vector<16x128xi32>
    %cst_18 = arith.constant 0.000000e+00 : f32
    %29 = vector.broadcast %cst_18 : f32 to vector<16x128xf32>
    %30 = arith.maximumf %25, %29 : vector<16x128xf32>
    %31 = math.absf %25 : vector<16x128xf32>
    %cst_19 = arith.constant 0.000000e+00 : f32
    %32 = vector.broadcast %cst_19 : f32 to vector<16x128xf32>
    %33 = arith.subf %32, %31 : vector<16x128xf32>
    %34 = math.exp %33 : vector<16x128xf32>
    %35 = math.log1p %34 : vector<16x128xf32>
    %36 = arith.addf %30, %35 : vector<16x128xf32>
    %37 = arith.select %28, %25, %36 : vector<16x128xi1>, vector<16x128xf32>
    %c0_20 = arith.constant 0 : index
    %c0_21 = arith.constant 0 : index
    %38 = vector.load %arg11[%c0_20, %c0_21] : memref<16x128xf32, #tpu.memory_space<vmem>>, vector<16x128xf32>
    tpu.vector_store %arg11[%c0_20, %c0_21], %37 {strides = array<i32>} : memref<16x128xf32, #tpu.memory_space<vmem>>, vector<16x128xf32>,
    %39 = vector.extract_strided_slice %37 {offsets = [0, 0], sizes = [16, 32], strides = [1, 1]} : vector<16x128xf32> to vector<16x32xf32>
    %40 = vector.extract_strided_slice %37 {offsets = [0, 32], sizes = [16, 32], strides = [1, 1]} : vector<16x128xf32> to vector<16x32xf32>
    %c0_22 = arith.constant 0 : index
    %c0_23 = arith.constant 0 : index
    %41 = vector.load %arg2[%c0_22, %c0_23] : memref<16x32xf32, #tpu.memory_space<vmem>>, vector<16x32xf32>
    %cst_24 = arith.constant 5.000000e-01 : f32
    %42 = vector.broadcast %cst_24 : f32 to vector<16x32xf32>
    %43 = arith.mulf %42, %40 : vector<16x32xf32>
    %44 = math.exp %43 : vector<16x32xf32>
    %45 = arith.mulf %41, %44 : vector<16x32xf32>
    %46 = arith.addf %45, %39 : vector<16x32xf32>
    %47 = arith.truncf %46 : vector<16x32xf32> to vector<16x32xbf16>
    %c0_25 = arith.constant 0 : index
    %c0_26 = arith.constant 0 : index
    %48 = vector.load %arg6[%c0_25, %c0_26] : memref<32x64xbf16, #tpu.memory_space<vmem>>, vector<32x64xbf16>
    %cst_27 = arith.constant dense<0.000000e+00> : vector<16x64xf32>
    %49 = tpu.matmul %47, %48, %cst_27 {dimension_numbers = #tpu.dot_dimension_numbers<[1], [0], [0], [1], [0, 0, 1, 1], [], []>} : vector<16x32xbf16>, vector<32x64xbf16>, vector<16x64xf32> -> vector<16x64xf32>
    %50 = vector.broadcast %3 : vector<1x64xf32> to vector<16x64xf32>
    %51 = arith.addf %49, %50 : vector<16x64xf32>
    %cst_28 = arith.constant 0.000000e+00 : f32
    %52 = vector.broadcast %cst_28 : f32 to vector<16x64xf32>
    %53 = arith.maximumf %51, %52 : vector<16x64xf32>
    %54 = arith.truncf %53 : vector<16x64xf32> to vector<16x64xbf16>
    %c0_29 = arith.constant 0 : index
    %c0_30 = arith.constant 0 : index
    %55 = vector.load %arg7[%c0_29, %c0_30] : memref<64x64xbf16, #tpu.memory_space<vmem>>, vector<64x64xbf16>
    %cst_31 = arith.constant dense<0.000000e+00> : vector<16x64xf32>
    %56 = tpu.matmul %54, %55, %cst_31 {dimension_numbers = #tpu.dot_dimension_numbers<[1], [0], [0], [1], [0, 0, 1, 1], [], []>} : vector<16x64xbf16>, vector<64x64xbf16>, vector<16x64xf32> -> vector<16x64xf32>
    %57 = vector.broadcast %4 : vector<1x64xf32> to vector<16x64xf32>
    %58 = arith.addf %56, %57 : vector<16x64xf32>
    %cst_32 = arith.constant 0.000000e+00 : f32
    %59 = vector.broadcast %cst_32 : f32 to vector<16x64xf32>
    %60 = arith.maximumf %58, %59 : vector<16x64xf32>
    %61 = arith.truncf %60 : vector<16x64xf32> to vector<16x64xbf16>
    %c0_33 = arith.constant 0 : index
    %c0_34 = arith.constant 0 : index
    %62 = vector.load %arg8[%c0_33, %c0_34] : memref<64x896xbf16, #tpu.memory_space<vmem>>, vector<64x896xbf16>
    %cst_35 = arith.constant dense<0.000000e+00> : vector<16x896xf32>
    %63 = tpu.matmul %61, %62, %cst_35 {dimension_numbers = #tpu.dot_dimension_numbers<[1], [0], [0], [1], [0, 0, 1, 1], [], []>} : vector<16x64xbf16>, vector<64x896xbf16>, vector<16x896xf32> -> vector<16x896xf32>
    %64 = vector.broadcast %5 : vector<1x896xf32> to vector<16x896xf32>
    %65 = arith.addf %63, %64 : vector<16x896xf32>
    %66 = arith.negf %65 : vector<16x896xf32>
    %67 = math.exp %66 : vector<16x896xf32>
    %cst_36 = arith.constant 1.000000e+00 : f32
    %68 = vector.broadcast %cst_36 : f32 to vector<16x896xf32>
    %69 = arith.addf %68, %67 : vector<16x896xf32>
    %70 = arith.divf %68, %69 : vector<16x896xf32>
    %c0_37 = arith.constant 0 : index
    %c0_38 = arith.constant 0 : index
    %71 = vector.load %arg10[%c0_37, %c0_38] : memref<16x896xf32, #tpu.memory_space<vmem>>, vector<16x896xf32>
    tpu.vector_store %arg10[%c0_37, %c0_38], %70 {strides = array<i32>} : memref<16x896xf32, #tpu.memory_space<vmem>>, vector<16x896xf32>,
    return
  }
  func.func @transform_0(%arg0: i32) -> (i32, i32) {
    %c0_i32 = arith.constant 0 : i32
    %c0_i32_0 = arith.constant 0 : i32
    return %arg0, %c0_i32 : i32, i32
  }
  func.func @transform_1(%arg0: i32) -> (i32, i32) {
    %c0_i32 = arith.constant 0 : i32
    %c0_i32_0 = arith.constant 0 : i32
    return %arg0, %c0_i32 : i32, i32
  }
  func.func @transform_2(%arg0: i32) -> (i32, i32) {
    %c0_i32 = arith.constant 0 : i32
    %c0_i32_0 = arith.constant 0 : i32
    %c0_i32_1 = arith.constant 0 : i32
    return %c0_i32, %c0_i32_0 : i32, i32
  }
  func.func @transform_3(%arg0: i32) -> (i32, i32) {
    %c0_i32 = arith.constant 0 : i32
    %c0_i32_0 = arith.constant 0 : i32
    %c0_i32_1 = arith.constant 0 : i32
    return %c0_i32, %c0_i32_0 : i32, i32
  }
  func.func @transform_4(%arg0: i32) -> (i32, i32) {
    %c0_i32 = arith.constant 0 : i32
    %c0_i32_0 = arith.constant 0 : i32
    %c0_i32_1 = arith.constant 0 : i32
    return %c0_i32, %c0_i32_0 : i32, i32
  }
  func.func @transform_5(%arg0: i32) -> (i32, i32) {
    %c0_i32 = arith.constant 0 : i32
    %c0_i32_0 = arith.constant 0 : i32
    %c0_i32_1 = arith.constant 0 : i32
    return %c0_i32, %c0_i32_0 : i32, i32
  }
  func.func @transform_6(%arg0: i32) -> (i32, i32) {
    %c0_i32 = arith.constant 0 : i32
    %c0_i32_0 = arith.constant 0 : i32
    %c0_i32_1 = arith.constant 0 : i32
    return %c0_i32, %c0_i32_0 : i32, i32
  }
  func.func @transform_7(%arg0: i32) -> (i32, i32) {
    %c0_i32 = arith.constant 0 : i32
    %c0_i32_0 = arith.constant 0 : i32
    %c0_i32_1 = arith.constant 0 : i32
    return %c0_i32, %c0_i32_0 : i32, i32
  }
  func.func @transform_8(%arg0: i32) -> (i32, i32) {
    %c0_i32 = arith.constant 0 : i32
    %c0_i32_0 = arith.constant 0 : i32
    %c0_i32_1 = arith.constant 0 : i32
    return %c0_i32, %c0_i32_0 : i32, i32
  }
  func.func @transform_9(%arg0: i32) -> (i32, i32) {
    %c0_i32 = arith.constant 0 : i32
    %c0_i32_0 = arith.constant 0 : i32
    return %arg0, %c0_i32 : i32, i32
  }
  func.func @transform_10(%arg0: i32) -> (i32, i32) {
    %c0_i32 = arith.constant 0 : i32
    %c0_i32_0 = arith.constant 0 : i32
    return %arg0, %c0_i32 : i32, i32
  }
}

</mosaic_0001>

<llo_original>
// kernel: tpu_custom_call.1
$region0: #{tpu_custom_call.1}
  #allocation0 [shape = 'u32[]', space=smem, size = 0x4, offset = 0x4, fixed_abs, tag = 'smem constant byte address 0x4 - core index']
  #allocation1 [shape = 'u32[144,128]{1,0:T(1,128)}', space=vmem, size = 0x12000, scoped, tag = 'internal scratch']
  %s0 = inlined_call_operand.vmem [shape: f32[16,784], index: 0, kind: input, shape index: {}]
  %s1 = inlined_call_operand.vmem [shape: f32[16,32], index: 1, kind: input, shape index: {}]
  %s2 = inlined_call_operand.vmem [shape: bf16[784,64], index: 2, kind: input, shape index: {}]
  %s3 = inlined_call_operand.vmem [shape: bf16[64,64], index: 3, kind: input, shape index: {}]
  %s4 = inlined_call_operand.vmem [shape: bf16[64,128], index: 4, kind: input, shape index: {}]
  %s5 = inlined_call_operand.vmem [shape: bf16[32,64], index: 5, kind: input, shape index: {}]
  %s6 = inlined_call_operand.vmem [shape: bf16[64,64], index: 6, kind: input, shape index: {}]
  %s7 = inlined_call_operand.vmem [shape: bf16[64,896], index: 7, kind: input, shape index: {}]
  %s8 = inlined_call_operand.vmem [shape: f32[1,1536], index: 8, kind: input, shape index: {}]
  %s9 = inlined_call_operand.hbm [shape: f32[16,896], index: 9, kind: output, shape index: {0}]
  %s10 = inlined_call_operand.hbm [shape: f32[16,128], index: 10, kind: output, shape index: {1}]
  %11 = xla_tuple %s9, %s10
  %s12 = sld [smem:[#allocation0]]
  $region54: #{tpu_custom_call.1} parent=0
    _
  %s14 = ssub.s32 1, %s12
  %s15 = scalar_select 0, %s14, %s12
  $region1: #{tpu_custom_call.1} parent=0
    #allocation2 [shape = 'u8[57344]{0}', space=vmem, size = 0xe000, scoped, tag = 'output window, operand 0, single buffered']
    #allocation3 [shape = 's32[1]{0}', space=sflag, size = 0x4, scoped, tag = 'scoped memory for tpu_custom_call.1']
    #allocation4 [shape = 'u8[8192]{0}', space=vmem, size = 0x2000, scoped, tag = 'output window, operand 1, single buffered']
    #allocation5 [shape = 's32[1]{0}', space=sflag, size = 0x4, scoped, tag = 'scoped memory for tpu_custom_call.1']
    %16 = vsyncpa [#allocation3], 0
    %17 = vsyncpa [#allocation5], 0
    // Predicated region
    $region2: #{tpu_custom_call.1} parent=1 // pred_check
      _
    $region3: #{tpu_custom_call.1} parent=1 // pred_check_branch
      %19 = sbr.rel (0) target = $region5
    $region4: #{tpu_custom_call.1} parent=1 // pred_region
      _
    $region5: #{tpu_custom_call.1} parent=1 // pred_fallthru
      _
    // Predicated region
    $region6: #{tpu_custom_call.1} parent=1 // pred_check
      _
    $region7: #{tpu_custom_call.1} parent=1 // pred_check_branch
      %21 = sbr.rel (0) target = $region9
    $region8: #{tpu_custom_call.1} parent=1 // pred_region
      _
    $region9: #{tpu_custom_call.1} parent=1 // pred_fallthru
      _
    // Predicated region
    $region10: #{tpu_custom_call.1} parent=1 // pred_check
      _
    $region11: #{tpu_custom_call.1} parent=1 // pred_check_branch
      %23 = sbr.rel (0) target = $region13
    $region12: #{tpu_custom_call.1} parent=1 // pred_region
      _
    $region13: #{tpu_custom_call.1} parent=1 // pred_fallthru
      _
    // Predicated region
    $region14: #{tpu_custom_call.1} parent=1 // pred_check
      _
    $region15: #{tpu_custom_call.1} parent=1 // pred_check_branch
      %25 = sbr.rel (0) target = $region17
    $region16: #{tpu_custom_call.1} parent=1 // pred_region
      _
    $region17: #{tpu_custom_call.1} parent=1 // pred_fallthru
      _
    // Predicated region
    $region18: #{tpu_custom_call.1} parent=1 // pred_check
      _
    $region19: #{tpu_custom_call.1} parent=1 // pred_check_branch
      %27 = sbr.rel (0) target = $region21
    $region20: #{tpu_custom_call.1} parent=1 // pred_region
      _
    $region21: #{tpu_custom_call.1} parent=1 // pred_fallthru
      _
    // Predicated region
    $region22: #{tpu_custom_call.1} parent=1 // pred_check
      _
    $region23: #{tpu_custom_call.1} parent=1 // pred_check_branch
      %29 = sbr.rel (0) target = $region25
    $region24: #{tpu_custom_call.1} parent=1 // pred_region
      _
    $region25: #{tpu_custom_call.1} parent=1 // pred_fallthru
      _
    // Predicated region
    $region26: #{tpu_custom_call.1} parent=1 // pred_check
      _
    $region27: #{tpu_custom_call.1} parent=1 // pred_check_branch
      %31 = sbr.rel (0) target = $region29
    $region28: #{tpu_custom_call.1} parent=1 // pred_region
      _
    $region29: #{tpu_custom_call.1} parent=1 // pred_fallthru
      _
    // Predicated region
    $region30: #{tpu_custom_call.1} parent=1 // pred_check
      _
    $region31: #{tpu_custom_call.1} parent=1 // pred_check_branch
      %33 = sbr.rel (0) target = $region33
    $region32: #{tpu_custom_call.1} parent=1 // pred_region
      _
    $region33: #{tpu_custom_call.1} parent=1 // pred_fallthru
      _
    // Predicated region
    $region34: #{tpu_custom_call.1} parent=1 // pred_check
      _
    $region35: #{tpu_custom_call.1} parent=1 // pred_check_branch
      %35 = sbr.rel (0) target = $region37
    $region36: #{tpu_custom_call.1} parent=1 // pred_region
      _
    $region37: #{tpu_custom_call.1} parent=1 // pred_fallthru
      _
    %v37 = vld [vmem:[%s8] sm:$0x1]
    %v38 = vld [vmem:[%s8 + $0x1] sm:$0x1]
    %v39 = vld [vmem:[%s8 + $0x2] sm:$0x1]
    %v40 = vld [vmem:[%s8 + $0x3] sm:$0x1]
    %v41 = vld [vmem:[%s8 + $0x4] sm:$0x1]
    %v42 = vld [vmem:[%s8 + $0x5] sm:$0xff]
    %v43 = vld [vmem:[%s0] sm:$0xff]
    %v44 = vld [vmem:[%s0 + $0x8] sm:$0xff]
    %v45 = vld [vmem:[%s0 + $0x10] sm:$0xff]
    %v46 = vld [vmem:[%s0 + $0x18] sm:$0xff]
    %v47 = vld [vmem:[%s0 + $0x20] sm:$0xff]
    %v48 = vld [vmem:[%s0 + $0x28] sm:$0xff]
    %v49 = vld [vmem:[%s0 + $0x30] sm:$0xff]
    %v50 = vld [vmem:[%s0 + $0x38] sm:$0xff]
    %v51 = vld [vmem:[%s0 + $0x40] sm:$0xff]
    %v52 = vld [vmem:[%s0 + $0x48] sm:$0xff]
    %v53 = vld [vmem:[%s0 + $0x50] sm:$0xff]
    %v54 = vld [vmem:[%s0 + $0x58] sm:$0xff]
    %v55 = vld [vmem:[%s0 + $0x60] sm:$0xff]
    %v56 = vld [vmem:[%s0 + $0x68] sm:$0xff]
    %v57 = vpack.c.bf16 %v50, %v43
    %v58 = vpack.c.bf16 %v51, %v44
    %v59 = vpack.c.bf16 %v52, %v45
    %v60 = vpack.c.bf16 %v53, %v46
    %v61 = vpack.c.bf16 %v54, %v47
    %v62 = vpack.c.bf16 %v55, %v48
    %v63 = vpack.c.bf16 %v56, %v49
    %v64 = vld [vmem:[%s2] sm:$0xf]
    %v65 = vld [vmem:[%s2 + $0x4] sm:$0xf]
    %v66 = vld [vmem:[%s2 + $0x8] sm:$0xf]
    %v67 = vld [vmem:[%s2 + $0xc] sm:$0xf]
    %v68 = vld [vmem:[%s2 + $0x10] sm:$0xf]
    %v69 = vld [vmem:[%s2 + $0x14] sm:$0xf]
    %v70 = vld [vmem:[%s2 + $0x18] sm:$0xf]
    %v71 = vld [vmem:[%s2 + $0x1c] sm:$0xf]
    %v72 = vld [vmem:[%s2 + $0x20] sm:$0xf]
    %v73 = vld [vmem:[%s2 + $0x24] sm:$0xf]
    %v74 = vld [vmem:[%s2 + $0x28] sm:$0xf]
    %v75 = vld [vmem:[%s2 + $0x2c] sm:$0xf]
    %v76 = vld [vmem:[%s2 + $0x30] sm:$0xf]
    %v77 = vld [vmem:[%s2 + $0x34] sm:$0xf]
    %v78 = vld [vmem:[%s2 + $0x38] sm:$0xf]
    %v79 = vld [vmem:[%s2 + $0x3c] sm:$0xf]
    %v80 = vld [vmem:[%s2 + $0x40] sm:$0xf]
    %v81 = vld [vmem:[%s2 + $0x44] sm:$0xf]
    %v82 = vld [vmem:[%s2 + $0x48] sm:$0xf]
    %v83 = vld [vmem:[%s2 + $0x4c] sm:$0xf]
    %v84 = vld [vmem:[%s2 + $0x50] sm:$0xf]
    %v85 = vld [vmem:[%s2 + $0x54] sm:$0xf]
    %v86 = vld [vmem:[%s2 + $0x58] sm:$0xf]
    %v87 = vld [vmem:[%s2 + $0x5c] sm:$0xf]
    %v88 = vld [vmem:[%s2 + $0x60] sm:$0xf]
    %v89 = vld [vmem:[%s2 + $0x64] sm:$0xf]
    %v90 = vld [vmem:[%s2 + $0x68] sm:$0xf]
    %v91 = vld [vmem:[%s2 + $0x6c] sm:$0xf]
    %v92 = vld [vmem:[%s2 + $0x70] sm:$0xf]
    %v93 = vld [vmem:[%s2 + $0x74] sm:$0xf]
    %v94 = vld [vmem:[%s2 + $0x78] sm:$0xf]
    %v95 = vld [vmem:[%s2 + $0x7c] sm:$0xf]
    %v96 = vld [vmem:[%s2 + $0x80] sm:$0xf]
    %v97 = vld [vmem:[%s2 + $0x84] sm:$0xf]
    %v98 = vld [vmem:[%s2 + $0x88] sm:$0xf]
    %v99 = vld [vmem:[%s2 + $0x8c] sm:$0xf]
    %v100 = vld [vmem:[%s2 + $0x90] sm:$0xf]
    %v101 = vld [vmem:[%s2 + $0x94] sm:$0xf]
    %v102 = vld [vmem:[%s2 + $0x98] sm:$0xf]
    %v103 = vld [vmem:[%s2 + $0x9c] sm:$0xf]
    %v104 = vld [vmem:[%s2 + $0xa0] sm:$0xf]
    %v105 = vld [vmem:[%s2 + $0xa4] sm:$0xf]
    %v106 = vld [vmem:[%s2 + $0xa8] sm:$0xf]
    %v107 = vld [vmem:[%s2 + $0xac] sm:$0xf]
    %v108 = vld [vmem:[%s2 + $0xb0] sm:$0xf]
    %v109 = vld [vmem:[%s2 + $0xb4] sm:$0xf]
    %v110 = vld [vmem:[%s2 + $0xb8] sm:$0xf]
    %v111 = vld [vmem:[%s2 + $0xbc] sm:$0xf]
    %v112 = vld [vmem:[%s2 + $0xc0] sm:$0xf]
    %v113 = vld [vmem:[%s2 + $0xc4] sm:$0xf]
    %v114 = vld [vmem:[%s2 + $0xc8] sm:$0xf]
    %v115 = vld [vmem:[%s2 + $0xcc] sm:$0xf]
    %v116 = vld [vmem:[%s2 + $0xd0] sm:$0xf]
    %v117 = vld [vmem:[%s2 + $0xd4] sm:$0xf]
    %v118 = vld [vmem:[%s2 + $0xd8] sm:$0xf]
    %v119 = vld [vmem:[%s2 + $0xdc] sm:$0xf]
    %v120 = vld [vmem:[%s2 + $0xe0] sm:$0xf]
    %v121 = vld [vmem:[%s2 + $0xe4] sm:$0xf]
    %v122 = vld [vmem:[%s2 + $0xe8] sm:$0xf]
    %v123 = vld [vmem:[%s2 + $0xec] sm:$0xf]
    %v124 = vld [vmem:[%s2 + $0xf0] sm:$0xf]
    %v125 = vld [vmem:[%s2 + $0xf4] sm:$0xf]
    %v126 = vld [vmem:[%s2 + $0xf8] sm:$0xf]
    %v127 = vld [vmem:[%s2 + $0xfc] sm:$0xf]
    %v128 = vld [vmem:[%s2 + $0x100] sm:$0xf]
    %v129 = vld [vmem:[%s2 + $0x104] sm:$0xf]
    %v130 = vld [vmem:[%s2 + $0x108] sm:$0xf]
    %v131 = vld [vmem:[%s2 + $0x10c] sm:$0xf]
    %v132 = vld [vmem:[%s2 + $0x110] sm:$0xf]
    %v133 = vld [vmem:[%s2 + $0x114] sm:$0xf]
    %v134 = vld [vmem:[%s2 + $0x118] sm:$0xf]
    %v135 = vld [vmem:[%s2 + $0x11c] sm:$0xf]
    %v136 = vld [vmem:[%s2 + $0x120] sm:$0xf]
    %v137 = vld [vmem:[%s2 + $0x124] sm:$0xf]
    %v138 = vld [vmem:[%s2 + $0x128] sm:$0xf]
    %v139 = vld [vmem:[%s2 + $0x12c] sm:$0xf]
    %v140 = vld [vmem:[%s2 + $0x130] sm:$0xf]
    %v141 = vld [vmem:[%s2 + $0x134] sm:$0xf]
    %v142 = vld [vmem:[%s2 + $0x138] sm:$0xf]
    %v143 = vld [vmem:[%s2 + $0x13c] sm:$0xf]
    %v144 = vld [vmem:[%s2 + $0x140] sm:$0xf]
    %v145 = vld [vmem:[%s2 + $0x144] sm:$0xf]
    %v146 = vld [vmem:[%s2 + $0x148] sm:$0xf]
    %v147 = vld [vmem:[%s2 + $0x14c] sm:$0xf]
    %v148 = vld [vmem:[%s2 + $0x150] sm:$0xf]
    %v149 = vld [vmem:[%s2 + $0x154] sm:$0xf]
    %v150 = vld [vmem:[%s2 + $0x158] sm:$0xf]
    %v151 = vld [vmem:[%s2 + $0x15c] sm:$0xf]
    %v152 = vld [vmem:[%s2 + $0x160] sm:$0xf]
    %v153 = vld [vmem:[%s2 + $0x164] sm:$0xf]
    %v154 = vld [vmem:[%s2 + $0x168] sm:$0xf]
    %v155 = vld [vmem:[%s2 + $0x16c] sm:$0xf]
    %v156 = vld [vmem:[%s2 + $0x170] sm:$0xf]
    %v157 = vld [vmem:[%s2 + $0x174] sm:$0xf]
    %v158 = vld [vmem:[%s2 + $0x178] sm:$0xf]
    %v159 = vld [vmem:[%s2 + $0x17c] sm:$0xf]
    %v160 = vld [vmem:[%s2 + $0x180] sm:$0xf]
    %v161 = vld [vmem:[%s2 + $0x184] sm:$0xf]
    %v163 = vlaneseq
    %v164 = vshrl.u32 %v163, 7
    %v165 = vsub.s32 0, %v164
    %v166 = vrot.slane %v37, %v165
    %v266 = vunpack.c.l.b16 %v64
    %v267 = vunpack.c.l.b16 %v65
    %v268 = vunpack.c.l.b16 %v66
    %v269 = vunpack.c.l.b16 %v67
    %v270 = vunpack.c.l.b16 %v68
    %v271 = vunpack.c.l.b16 %v69
    %v272 = vunpack.c.l.b16 %v70
    %v273 = vunpack.c.l.b16 %v71
    %v274 = vunpack.c.l.b16 %v72
    %v275 = vunpack.c.l.b16 %v73
    %v276 = vunpack.c.l.b16 %v74
    %v277 = vunpack.c.l.b16 %v75
    %v278 = vunpack.c.l.b16 %v76
    %v279 = vunpack.c.l.b16 %v77
    %v280 = vunpack.c.l.b16 %v78
    %v281 = vunpack.c.l.b16 %v79
    %v282 = vunpack.c.l.b16 %v80
    %v283 = vunpack.c.l.b16 %v81
    %v284 = vunpack.c.l.b16 %v82
    %v285 = vunpack.c.l.b16 %v83
    %v286 = vunpack.c.l.b16 %v84
    %v287 = vunpack.c.l.b16 %v85
    %v288 = vunpack.c.l.b16 %v86
    %v289 = vunpack.c.l.b16 %v87
    %v290 = vunpack.c.l.b16 %v88
    %v291 = vunpack.c.l.b16 %v89
    %v292 = vunpack.c.l.b16 %v90
    %v293 = vunpack.c.l.b16 %v91
    %v294 = vunpack.c.l.b16 %v92
    %v295 = vunpack.c.l.b16 %v93
    %v296 = vunpack.c.l.b16 %v94
    %v297 = vunpack.c.l.b16 %v95
    %v298 = vunpack.c.l.b16 %v96
    %v299 = vunpack.c.l.b16 %v97
    %v300 = vunpack.c.l.b16 %v98
    %v301 = vunpack.c.l.b16 %v99
    %v302 = vunpack.c.l.b16 %v100
    %v303 = vunpack.c.l.b16 %v101
    %v304 = vunpack.c.l.b16 %v102
    %v305 = vunpack.c.l.b16 %v103
    %v306 = vunpack.c.l.b16 %v104
    %v307 = vunpack.c.l.b16 %v105
    %v308 = vunpack.c.l.b16 %v106
    %v309 = vunpack.c.l.b16 %v107
    %v310 = vunpack.c.l.b16 %v108
    %v311 = vunpack.c.l.b16 %v109
    %v312 = vunpack.c.l.b16 %v110
    %v313 = vunpack.c.l.b16 %v111
    %v314 = vunpack.c.l.b16 %v112
    %v315 = vunpack.c.l.b16 %v113
    %v316 = vunpack.c.l.b16 %v114
    %v317 = vunpack.c.l.b16 %v115
    %v318 = vunpack.c.l.b16 %v116
    %v319 = vunpack.c.l.b16 %v117
    %v320 = vunpack.c.l.b16 %v118
    %v321 = vunpack.c.l.b16 %v119
    %v322 = vunpack.c.l.b16 %v120
    %v323 = vunpack.c.l.b16 %v121
    %v324 = vunpack.c.l.b16 %v122
    %v325 = vunpack.c.l.b16 %v123
    %v326 = vunpack.c.l.b16 %v124
    %v327 = vunpack.c.l.b16 %v125
    %v328 = vunpack.c.l.b16 %v126
    %v329 = vunpack.c.l.b16 %v127
    %v330 = vunpack.c.l.b16 %v128
    %v331 = vunpack.c.l.b16 %v129
    %v332 = vunpack.c.l.b16 %v130
    %v333 = vunpack.c.l.b16 %v131
    %v334 = vunpack.c.l.b16 %v132
    %v335 = vunpack.c.l.b16 %v133
    %v336 = vunpack.c.l.b16 %v134
    %v337 = vunpack.c.l.b16 %v135
    %v338 = vunpack.c.l.b16 %v136
    %v339 = vunpack.c.l.b16 %v137
    %v340 = vunpack.c.l.b16 %v138
    %v341 = vunpack.c.l.b16 %v139
    %v342 = vunpack.c.l.b16 %v140
    %v343 = vunpack.c.l.b16 %v141
    %v344 = vunpack.c.l.b16 %v142
    %v345 = vunpack.c.l.b16 %v143
    %v346 = vunpack.c.l.b16 %v144
    %v347 = vunpack.c.l.b16 %v145
    %v348 = vunpack.c.l.b16 %v146
    %v349 = vunpack.c.l.b16 %v147
    %v350 = vunpack.c.l.b16 %v148
    %v351 = vunpack.c.l.b16 %v149
    %v352 = vunpack.c.l.b16 %v150
    %v353 = vunpack.c.l.b16 %v151
    %v354 = vunpack.c.l.b16 %v152
    %v355 = vunpack.c.l.b16 %v153
    %v356 = vunpack.c.l.b16 %v154
    %v357 = vunpack.c.l.b16 %v155
    %v358 = vunpack.c.l.b16 %v156
    %v359 = vunpack.c.l.b16 %v157
    %v360 = vunpack.c.l.b16 %v158
    %v361 = vunpack.c.l.b16 %v159
    %v362 = vunpack.c.l.b16 %v160
    %v363 = vunpack.c.l.b16 %v161
    %v364 = vpack.c.b16 %v267, %v266
    %v365 = vpack.c.b16 %v269, %v268
    %v366 = vpack.c.b16 %v271, %v270
    %v367 = vpack.c.b16 %v273, %v272
    %v368 = vpack.c.b16 %v275, %v274
    %v369 = vpack.c.b16 %v277, %v276
    %v370 = vpack.c.b16 %v279, %v278
    %v371 = vpack.c.b16 %v281, %v280
    %v372 = vpack.c.b16 %v283, %v282
    %v373 = vpack.c.b16 %v285, %v284
    %v374 = vpack.c.b16 %v287, %v286
    %v375 = vpack.c.b16 %v289, %v288
    %v376 = vpack.c.b16 %v291, %v290
    %v377 = vpack.c.b16 %v293, %v292
    %v378 = vpack.c.b16 %v295, %v294
    %v379 = vpack.c.b16 %v297, %v296
    %v380 = vpack.c.b16 %v299, %v298
    %v381 = vpack.c.b16 %v301, %v300
    %v382 = vpack.c.b16 %v303, %v302
    %v383 = vpack.c.b16 %v305, %v304
    %v384 = vpack.c.b16 %v307, %v306
    %v385 = vpack.c.b16 %v309, %v308
    %v386 = vpack.c.b16 %v311, %v310
    %v387 = vpack.c.b16 %v313, %v312
    %v388 = vpack.c.b16 %v315, %v314
    %v389 = vpack.c.b16 %v317, %v316
    %v390 = vpack.c.b16 %v319, %v318
    %v391 = vpack.c.b16 %v321, %v320
    %v392 = vpack.c.b16 %v323, %v322
    %v393 = vpack.c.b16 %v325, %v324
    %v394 = vpack.c.b16 %v327, %v326
    %v395 = vpack.c.b16 %v329, %v328
    %v396 = vpack.c.b16 %v331, %v330
    %v397 = vpack.c.b16 %v333, %v332
    %v398 = vpack.c.b16 %v335, %v334
    %v399 = vpack.c.b16 %v337, %v336
    %v400 = vpack.c.b16 %v339, %v338
    %v401 = vpack.c.b16 %v341, %v340
    %v402 = vpack.c.b16 %v343, %v342
    %v403 = vpack.c.b16 %v345, %v344
    %v404 = vpack.c.b16 %v347, %v346
    %v405 = vpack.c.b16 %v349, %v348
    %v406 = vpack.c.b16 %v351, %v350
    %v407 = vpack.c.b16 %v353, %v352
    %v408 = vpack.c.b16 %v355, %v354
    %v409 = vpack.c.b16 %v357, %v356
    %v410 = vpack.c.b16 %v359, %v358
    %v411 = vpack.c.b16 %v361, %v360
    %v412 = vpack.c.b16 %v363, %v362
    %vm462 = vcmask 130048
    %v464 = vsel %vm462, %v63, 0
    %466 = vmatprep.subr.bf16.mxu0 0
    %467 = vmatpush1.bf16.msra.mxu0 %v364
    %468 = vmatprep.subr.bf16.mxu0 0
    %469 = vmatpush1.bf16.msra.mxu0 %v365
    %470 = vmatprep.subr.bf16.mxu0 0
    %471 = vmatpush1.bf16.msra.mxu0 %v366
    %472 = vmatprep.subr.bf16.mxu0 0
    %473 = vmatpush1.bf16.msra.mxu0 %v367
    %474 = vmatprep.subr.bf16.mxu0 0
    %475 = vmatpush1.bf16.msra.mxu0 %v368
    %476 = vmatprep.subr.bf16.mxu0 0
    %477 = vmatpush1.bf16.msra.mxu0 %v369
    %478 = vmatprep.subr.bf16.mxu0 0
    %479 = vmatpush1.bf16.msra.mxu0 %v370
    %480 = vmatprep.subr.bf16.mxu0 0
    %481 = vmatpush1.bf16.msra.mxu0 %v371
    %482 = vmatprep.subr.bf16.mxu0 0
    %483 = vmatpush1.bf16.msra.mxu0 %v372
    %484 = vmatprep.subr.bf16.mxu0 0
    %485 = vmatpush1.bf16.msra.mxu0 %v373
    %486 = vmatprep.subr.bf16.mxu0 0
    %487 = vmatpush1.bf16.msra.mxu0 %v374
    %488 = vmatprep.subr.bf16.mxu0 0
    %489 = vmatpush1.bf16.msra.mxu0 %v375
    %490 = vmatprep.subr.bf16.mxu0 0
    %491 = vmatpush1.bf16.msra.mxu0 %v376
    %492 = vmatprep.subr.bf16.mxu0 0
    %493 = vmatpush1.bf16.msra.mxu0 %v377
    %494 = vmatprep.subr.bf16.mxu0 0
    %495 = vmatpush1.bf16.msra.mxu0 %v378
    %496 = vmatprep.subr.bf16.mxu0 0
    %497 = vmatpush1.bf16.msra.mxu0 %v379
    %498 = vmatprep.mubr.bf16.mxu0 %v58
    %499 = vmatmul.mubr.bf16.gmra.mrb[0].mxu0 %v57
    %v500 = vpop.f32.mrb[0].mxu0
    %v501 = vadd.f32 %v166, %v500
    %v502 = vpop.f32.mrb[0].mxu0
    %v503 = vpop.f32.mrb[0].mxu0
    %v504 = vadd.f32 %v166, %v503
    %v505 = vpop.f32.mrb[0].mxu0
    %506 = vdwg.mxu0
    %507 = vmatprep.subr.bf16.mxu0 0
    %508 = vmatpush1.bf16.msra.mxu0 %v380
    %509 = vmatprep.subr.bf16.mxu0 0
    %510 = vmatpush1.bf16.msra.mxu0 %v381
    %511 = vmatprep.subr.bf16.mxu0 0
    %512 = vmatpush1.bf16.msra.mxu0 %v382
    %513 = vmatprep.subr.bf16.mxu0 0
    %514 = vmatpush1.bf16.msra.mxu0 %v383
    %515 = vmatprep.subr.bf16.mxu0 0
    %516 = vmatpush1.bf16.msra.mxu0 %v384
    %517 = vmatprep.subr.bf16.mxu0 0
    %518 = vmatpush1.bf16.msra.mxu0 %v385
    %519 = vmatprep.subr.bf16.mxu0 0
    %520 = vmatpush1.bf16.msra.mxu0 %v386
    %521 = vmatprep.subr.bf16.mxu0 0
    %522 = vmatpush1.bf16.msra.mxu0 %v387
    %523 = vmatprep.subr.bf16.mxu0 0
    %524 = vmatpush1.bf16.msra.mxu0 %v388
    %525 = vmatprep.subr.bf16.mxu0 0
    %526 = vmatpush1.bf16.msra.mxu0 %v389
    %527 = vmatprep.subr.bf16.mxu0 0
    %528 = vmatpush1.bf16.msra.mxu0 %v390
    %529 = vmatprep.subr.bf16.mxu0 0
    %530 = vmatpush1.bf16.msra.mxu0 %v391
    %531 = vmatprep.subr.bf16.mxu0 0
    %532 = vmatpush1.bf16.msra.mxu0 %v392
    %533 = vmatprep.subr.bf16.mxu0 0
    %534 = vmatpush1.bf16.msra.mxu0 %v393
    %535 = vmatprep.subr.bf16.mxu0 0
    %536 = vmatpush1.bf16.msra.mxu0 %v394
    %537 = vmatprep.subr.bf16.mxu0 0
    %538 = vmatpush1.bf16.msra.mxu0 %v395
    %539 = vmatprep.mubr.bf16.mxu0 %v60
    %540 = vmatmul.mubr.bf16.gmra.mrb[0].mxu0 %v59
    %v541 = vpop.f32.mrb[0].mxu0
    %v542 = vadd.f32 %v501, %v541
    %v543 = vpop.f32.mrb[0].mxu0
    %v544 = vpop.f32.mrb[0].mxu0
    %v545 = vadd.f32 %v504, %v544
    %v546 = vpop.f32.mrb[0].mxu0
    %547 = vdwg.mxu0
    %548 = vmatprep.subr.bf16.mxu0 0
    %549 = vmatpush1.bf16.msra.mxu0 %v396
    %550 = vmatprep.subr.bf16.mxu0 0
    %551 = vmatpush1.bf16.msra.mxu0 %v397
    %552 = vmatprep.subr.bf16.mxu0 0
    %553 = vmatpush1.bf16.msra.mxu0 %v398
    %554 = vmatprep.subr.bf16.mxu0 0
    %555 = vmatpush1.bf16.msra.mxu0 %v399
    %556 = vmatprep.subr.bf16.mxu0 0
    %557 = vmatpush1.bf16.msra.mxu0 %v400
    %558 = vmatprep.subr.bf16.mxu0 0
    %559 = vmatpush1.bf16.msra.mxu0 %v401
    %560 = vmatprep.subr.bf16.mxu0 0
    %561 = vmatpush1.bf16.msra.mxu0 %v402
    %562 = vmatprep.subr.bf16.mxu0 0
    %563 = vmatpush1.bf16.msra.mxu0 %v403
    %564 = vmatprep.subr.bf16.mxu0 0
    %565 = vmatpush1.bf16.msra.mxu0 %v404
    %566 = vmatprep.subr.bf16.mxu0 0
    %567 = vmatpush1.bf16.msra.mxu0 %v405
    %568 = vmatprep.subr.bf16.mxu0 0
    %569 = vmatpush1.bf16.msra.mxu0 %v406
    %570 = vmatprep.subr.bf16.mxu0 0
    %571 = vmatpush1.bf16.msra.mxu0 %v407
    %572 = vmatprep.subr.bf16.mxu0 0
    %573 = vmatpush1.bf16.msra.mxu0 %v408
    %574 = vmatprep.subr.bf16.mxu0 0
    %575 = vmatpush1.bf16.msra.mxu0 %v409
    %576 = vmatprep.subr.bf16.mxu0 0
    %577 = vmatpush1.bf16.msra.mxu0 %v410
    %578 = vmatprep.subr.bf16.mxu0 0
    %579 = vmatpush1.bf16.msra.mxu0 %v411
    %580 = vmatprep.mubr.bf16.mxu0 %v62
    %581 = vmatmul.mubr.bf16.gmra.mrb[0].mxu0 %v61
    %v582 = vpop.f32.mrb[0].mxu0
    %v583 = vadd.f32 %v542, %v582
    %v584 = vpop.f32.mrb[0].mxu0
    %v585 = vpop.f32.mrb[0].mxu0
    %v586 = vadd.f32 %v545, %v585
    %v587 = vpop.f32.mrb[0].mxu0
    %588 = vdwg.mxu0
    %589 = vmatprep.subr.bf16.mxu0 0
    %590 = vmatpush1.bf16.msra.mxu0 %v412
    %591 = vmatprep.subr.bf16.mxu0 0
    %592 = vmatpush1.bf16.msra.mxu0 0
    %593 = vmatprep.subr.bf16.mxu0 0
    %594 = vmatpush1.bf16.msra.mxu0 0
    %595 = vmatprep.subr.bf16.mxu0 0
    %596 = vmatpush1.bf16.msra.mxu0 0
    %597 = vmatprep.subr.bf16.mxu0 0
    %598 = vmatpush1.bf16.msra.mxu0 0
    %599 = vmatprep.subr.bf16.mxu0 0
    %600 = vmatpush1.bf16.msra.mxu0 0
    %601 = vmatprep.subr.bf16.mxu0 0
    %602 = vmatpush1.bf16.msra.mxu0 0
    %603 = vmatprep.subr.bf16.mxu0 0
    %604 = vmatpush1.bf16.msra.mxu0 0
    %605 = vmatprep.subr.bf16.mxu0 0
    %606 = vmatpush1.bf16.msra.mxu0 0
    %607 = vmatprep.subr.bf16.mxu0 0
    %608 = vmatpush1.bf16.msra.mxu0 0
    %609 = vmatprep.subr.bf16.mxu0 0
    %610 = vmatpush1.bf16.msra.mxu0 0
    %611 = vmatprep.subr.bf16.mxu0 0
    %612 = vmatpush1.bf16.msra.mxu0 0
    %613 = vmatprep.subr.bf16.mxu0 0
    %614 = vmatpush1.bf16.msra.mxu0 0
    %615 = vmatprep.subr.bf16.mxu0 0
    %616 = vmatpush1.bf16.msra.mxu0 0
    %617 = vmatprep.subr.bf16.mxu0 0
    %618 = vmatpush1.bf16.msra.mxu0 0
    %619 = vmatprep.subr.bf16.mxu0 0
    %620 = vmatpush1.bf16.msra.mxu0 0
    %621 = vmatprep.mubr.bf16.mxu0 0
    %622 = vmatmul.mubr.bf16.gmra.mrb[0].mxu0 %v464
    %v623 = vpop.f32.mrb[0].mxu0
    %v624 = vadd.f32 %v583, %v623
    %v625 = vpop.f32.mrb[0].mxu0
    %v626 = vpop.f32.mrb[0].mxu0
    %v627 = vadd.f32 %v586, %v626
    %v628 = vpop.f32.mrb[0].mxu0
    %629 = vdwg.mxu0
    %v630 = vmax.f32 %v624, 0.0
    %v631 = vmax.f32 %v627, 0.0
    %v632 = vpack.c.bf16 %v631, %v630
    %v633 = vld [vmem:[%s3] sm:$0xf]
    %v634 = vld [vmem:[%s3 + $0x4] sm:$0xf]
    %v635 = vld [vmem:[%s3 + $0x8] sm:$0xf]
    %v636 = vld [vmem:[%s3 + $0xc] sm:$0xf]
    %v637 = vld [vmem:[%s3 + $0x10] sm:$0xf]
    %v638 = vld [vmem:[%s3 + $0x14] sm:$0xf]
    %v639 = vld [vmem:[%s3 + $0x18] sm:$0xf]
    %v640 = vld [vmem:[%s3 + $0x1c] sm:$0xf]
    %v642 = vlaneseq
    %v643 = vshrl.u32 %v642, 7
    %v644 = vsub.s32 0, %v643
    %v645 = vrot.slane %v38, %v644
    %v655 = vunpack.c.l.b16 %v633
    %v656 = vunpack.c.l.b16 %v634
    %v657 = vunpack.c.l.b16 %v635
    %v658 = vunpack.c.l.b16 %v636
    %v659 = vunpack.c.l.b16 %v637
    %v660 = vunpack.c.l.b16 %v638
    %v661 = vunpack.c.l.b16 %v639
    %v662 = vunpack.c.l.b16 %v640
    %v663 = vpack.c.b16 %v656, %v655
    %v664 = vpack.c.b16 %v658, %v657
    %v665 = vpack.c.b16 %v660, %v659
    %v666 = vpack.c.b16 %v662, %v661
    %vm671 = vcmask 523264
    %v673 = vsel %vm671, %v632, 0
    %675 = vmatprep.subr.bf16.mxu0 0
    %676 = vmatpush1.bf16.msra.mxu0 %v663
    %677 = vmatprep.subr.bf16.mxu0 0
    %678 = vmatpush1.bf16.msra.mxu0 %v664
    %679 = vmatprep.subr.bf16.mxu0 0
    %680 = vmatpush1.bf16.msra.mxu0 %v665
    %681 = vmatprep.subr.bf16.mxu0 0
    %682 = vmatpush1.bf16.msra.mxu0 %v666
    %683 = vmatprep.subr.bf16.mxu0 0
    %684 = vmatpush1.bf16.msra.mxu0 0
    %685 = vmatprep.subr.bf16.mxu0 0
    %686 = vmatpush1.bf16.msra.mxu0 0
    %687 = vmatprep.subr.bf16.mxu0 0
    %688 = vmatpush1.bf16.msra.mxu0 0
    %689 = vmatprep.subr.bf16.mxu0 0
    %690 = vmatpush1.bf16.msra.mxu0 0
    %691 = vmatprep.subr.bf16.mxu0 0
    %692 = vmatpush1.bf16.msra.mxu0 0
    %693 = vmatprep.subr.bf16.mxu0 0
    %694 = vmatpush1.bf16.msra.mxu0 0
    %695 = vmatprep.subr.bf16.mxu0 0
    %696 = vmatpush1.bf16.msra.mxu0 0
    %697 = vmatprep.subr.bf16.mxu0 0
    %698 = vmatpush1.bf16.msra.mxu0 0
    %699 = vmatprep.subr.bf16.mxu0 0
    %700 = vmatpush1.bf16.msra.mxu0 0
    %701 = vmatprep.subr.bf16.mxu0 0
    %702 = vmatpush1.bf16.msra.mxu0 0
    %703 = vmatprep.subr.bf16.mxu0 0
    %704 = vmatpush1.bf16.msra.mxu0 0
    %705 = vmatprep.subr.bf16.mxu0 0
    %706 = vmatpush1.bf16.msra.mxu0 0
    %707 = vmatprep.mubr.bf16.mxu0 0
    %708 = vmatmul.mubr.bf16.gmra.mrb[0].mxu0 %v673
    %v709 = vpop.f32.mrb[0].mxu0
    %v710 = vadd.f32 %v645, %v709
    %v711 = vpop.f32.mrb[0].mxu0
    %v712 = vpop.f32.mrb[0].mxu0
    %v713 = vadd.f32 %v645, %v712
    %v714 = vpop.f32.mrb[0].mxu0
    %715 = vdwg.mxu0
    %v716 = vmax.f32 %v710, 0.0
    %v717 = vmax.f32 %v713, 0.0
    %v718 = vpack.c.bf16 %v717, %v716
    %v719 = vld [vmem:[%s4] sm:$0xf]
    %v720 = vld [vmem:[%s4 + $0x4] sm:$0xf]
    %v721 = vld [vmem:[%s4 + $0x8] sm:$0xf]
    %v722 = vld [vmem:[%s4 + $0xc] sm:$0xf]
    %v723 = vld [vmem:[%s4 + $0x10] sm:$0xf]
    %v724 = vld [vmem:[%s4 + $0x14] sm:$0xf]
    %v725 = vld [vmem:[%s4 + $0x18] sm:$0xf]
    %v726 = vld [vmem:[%s4 + $0x1c] sm:$0xf]
    %v728 = vlaneseq
    %v729 = vshrl.u32 %v728, 7
    %v730 = vsub.s32 0, %v729
    %v731 = vrot.slane %v39, %v730
    %v741 = vunpack.c.l.b16 %v719
    %v742 = vunpack.c.l.b16 %v720
    %v743 = vunpack.c.l.b16 %v721
    %v744 = vunpack.c.l.b16 %v722
    %v745 = vunpack.c.l.b16 %v723
    %v746 = vunpack.c.l.b16 %v724
    %v747 = vunpack.c.l.b16 %v725
    %v748 = vunpack.c.l.b16 %v726
    %v749 = vpack.c.b16 %v742, %v741
    %v750 = vpack.c.b16 %v744, %v743
    %v751 = vpack.c.b16 %v746, %v745
    %v752 = vpack.c.b16 %v748, %v747
    %v758 = vsel %vm671, %v718, 0
    %760 = vmatprep.subr.bf16.mxu0 0
    %761 = vmatpush1.bf16.msra.mxu0 %v749
    %762 = vmatprep.subr.bf16.mxu0 0
    %763 = vmatpush1.bf16.msra.mxu0 %v750
    %764 = vmatprep.subr.bf16.mxu0 0
    %765 = vmatpush1.bf16.msra.mxu0 %v751
    %766 = vmatprep.subr.bf16.mxu0 0
    %767 = vmatpush1.bf16.msra.mxu0 %v752
    %768 = vmatprep.subr.bf16.mxu0 0
    %769 = vmatpush1.bf16.msra.mxu0 0
    %770 = vmatprep.subr.bf16.mxu0 0
    %771 = vmatpush1.bf16.msra.mxu0 0
    %772 = vmatprep.subr.bf16.mxu0 0
    %773 = vmatpush1.bf16.msra.mxu0 0
    %774 = vmatprep.subr.bf16.mxu0 0
    %775 = vmatpush1.bf16.msra.mxu0 0
    %776 = vmatprep.subr.bf16.mxu0 0
    %777 = vmatpush1.bf16.msra.mxu0 0
    %778 = vmatprep.subr.bf16.mxu0 0
    %779 = vmatpush1.bf16.msra.mxu0 0
    %780 = vmatprep.subr.bf16.mxu0 0
    %781 = vmatpush1.bf16.msra.mxu0 0
    %782 = vmatprep.subr.bf16.mxu0 0
    %783 = vmatpush1.bf16.msra.mxu0 0
    %784 = vmatprep.subr.bf16.mxu0 0
    %785 = vmatpush1.bf16.msra.mxu0 0
    %786 = vmatprep.subr.bf16.mxu0 0
    %787 = vmatpush1.bf16.msra.mxu0 0
    %788 = vmatprep.subr.bf16.mxu0 0
    %789 = vmatpush1.bf16.msra.mxu0 0
    %790 = vmatprep.subr.bf16.mxu0 0
    %791 = vmatpush1.bf16.msra.mxu0 0
    %792 = vmatprep.mubr.bf16.mxu0 0
    %793 = vmatmul.mubr.bf16.gmra.mrb[0].mxu0 %v758
    %v794 = vpop.f32.mrb[0].mxu0
    %v795 = vadd.f32 %v731, %v794
    %v796 = vpop.f32.mrb[0].mxu0
    %v797 = vpop.f32.mrb[0].mxu0
    %v798 = vadd.f32 %v731, %v797
    %v799 = vpop.f32.mrb[0].mxu0
    %800 = vdwg.mxu0
    %v801 = vlaneseq
    %v802 = vand.u32 %v801, 127
    %vm803 = vcmp.lt.s32.totalorder %v802, 32
    %v804 = vmax.f32 %v795, 0.0
    %v805 = vmax.f32 %v798, 0.0
    %v806 = vand.u32 2147483647, %v795
    %v807 = vand.u32 2147483647, %v798
    %v808 = vsub.f32 0.0, %v806
    %v809 = vsub.f32 0.0, %v807
    %v810 = vmul.f32 %v808, 1.442695
    %v811 = vpow.pop %v810
    %v812 = vmul.f32 %v809, 1.442695
    %v813 = vpow.pop %v812
    %v814 = vadd.f32 %v811, 1.0
    %v815 = vlog2.pop %v814
    %v816 = vmul.f32 %v815, 0.6931472
    %v817 = vmul.f32 -0.5, %v811
    %v818 = vadd.f32 %v817, 1.0
    %v819 = vmul.f32 %v818, %v811
    %v820 = vand.u32 2147483647, %v811
    %vm821 = vcmp.lt.f32.partialorder %v820, 0.0004427343
    %v822 = vsel %vm821, %v819, %v816
    %v823 = vadd.f32 %v813, 1.0
    %v824 = vlog2.pop %v823
    %v825 = vmul.f32 %v824, 0.6931472
    %v826 = vmul.f32 -0.5, %v813
    %v827 = vadd.f32 %v826, 1.0
    %v828 = vmul.f32 %v827, %v813
    %v829 = vand.u32 2147483647, %v813
    %vm830 = vcmp.lt.f32.partialorder %v829, 0.0004427343
    %v831 = vsel %vm830, %v828, %v825
    %v832 = vadd.f32 %v804, %v822
    %v833 = vadd.f32 %v805, %v831
    %v834 = vsel %vm803, %v795, %v832
    %v835 = vsel %vm803, %v798, %v833
    %836 = vst [vmem:[#allocation4] sm:$0xff] %v834
    %837 = vst [vmem:[#allocation4 + $0x8] sm:$0xff] %v835
    %v838 = vld [vmem:[%s1] sm:$0xff]
    %v839 = vld [vmem:[%s1 + $0x8] sm:$0xff]
    %v840 = vmul.f32 %v834, 0.5
    %v841 = vmul.f32 %v835, 0.5
    %v842 = vmul.f32 %v840, 1.442695
    %v843 = vpow.pop %v842
    %v844 = vmul.f32 %v841, 1.442695
    %v845 = vpow.pop %v844
    %848 = vrot.lane.b32.xlu0 %v843, 96
    %v849 = vpop.permute.xlu0 %848
    %850 = vrot.lane.b32.xlu0 %v845, 96
    %v851 = vpop.permute.xlu0 %850
    %v854 = vmul.f32 %v838, %v849
    %v855 = vmul.f32 %v839, %v851
    %v856 = vadd.f32 %v854, %v834
    %v857 = vadd.f32 %v855, %v835
    %v858 = vpack.c.bf16 %v857, %v856
    %v859 = vld [vmem:[%s5] sm:$0xf]
    %v860 = vld [vmem:[%s5 + $0x4] sm:$0xf]
    %v861 = vld [vmem:[%s5 + $0x8] sm:$0xf]
    %v862 = vld [vmem:[%s5 + $0xc] sm:$0xf]
    %v864 = vlaneseq
    %v865 = vshrl.u32 %v864, 7
    %v866 = vsub.s32 0, %v865
    %v867 = vrot.slane %v40, %v866
    %v873 = vunpack.c.l.b16 %v859
    %v874 = vunpack.c.l.b16 %v860
    %v875 = vunpack.c.l.b16 %v861
    %v876 = vunpack.c.l.b16 %v862
    %v877 = vpack.c.b16 %v874, %v873
    %v878 = vpack.c.b16 %v876, %v875
    %vm881 = vcmask 261120
    %v883 = vsel %vm881, %v858, 0
    %885 = vmatprep.subr.bf16.mxu0 0
    %886 = vmatpush1.bf16.msra.mxu0 %v877
    %887 = vmatprep.subr.bf16.mxu0 0
    %888 = vmatpush1.bf16.msra.mxu0 %v878
    %889 = vmatprep.subr.bf16.mxu0 0
    %890 = vmatpush1.bf16.msra.mxu0 0
    %891 = vmatprep.subr.bf16.mxu0 0
    %892 = vmatpush1.bf16.msra.mxu0 0
    %893 = vmatprep.subr.bf16.mxu0 0
    %894 = vmatpush1.bf16.msra.mxu0 0
    %895 = vmatprep.subr.bf16.mxu0 0
    %896 = vmatpush1.bf16.msra.mxu0 0
    %897 = vmatprep.subr.bf16.mxu0 0
    %898 = vmatpush1.bf16.msra.mxu0 0
    %899 = vmatprep.subr.bf16.mxu0 0
    %900 = vmatpush1.bf16.msra.mxu0 0
    %901 = vmatprep.subr.bf16.mxu0 0
    %902 = vmatpush1.bf16.msra.mxu0 0
    %903 = vmatprep.subr.bf16.mxu0 0
    %904 = vmatpush1.bf16.msra.mxu0 0
    %905 = vmatprep.subr.bf16.mxu0 0
    %906 = vmatpush1.bf16.msra.mxu0 0
    %907 = vmatprep.subr.bf16.mxu0 0
    %908 = vmatpush1.bf16.msra.mxu0 0
    %909 = vmatprep.subr.bf16.mxu0 0
    %910 = vmatpush1.bf16.msra.mxu0 0
    %911 = vmatprep.subr.bf16.mxu0 0
    %912 = vmatpush1.bf16.msra.mxu0 0
    %913 = vmatprep.subr.bf16.mxu0 0
    %914 = vmatpush1.bf16.msra.mxu0 0
    %915 = vmatprep.subr.bf16.mxu0 0
    %916 = vmatpush1.bf16.msra.mxu0 0
    %917 = vmatprep.mubr.bf16.mxu0 0
    %918 = vmatmul.mubr.bf16.gmra.mrb[0].mxu0 %v883
    %v919 = vpop.f32.mrb[0].mxu0
    %v920 = vadd.f32 %v867, %v919
    %v921 = vpop.f32.mrb[0].mxu0
    %v922 = vpop.f32.mrb[0].mxu0
    %v923 = vadd.f32 %v867, %v922
    %v924 = vpop.f32.mrb[0].mxu0
    %925 = vdwg.mxu0
    %v926 = vmax.f32 %v920, 0.0
    %v927 = vmax.f32 %v923, 0.0
    %v928 = vpack.c.bf16 %v927, %v926
    %v929 = vld [vmem:[%s6] sm:$0xf]
    %v930 = vld [vmem:[%s6 + $0x4] sm:$0xf]
    %v931 = vld [vmem:[%s6 + $0x8] sm:$0xf]
    %v932 = vld [vmem:[%s6 + $0xc] sm:$0xf]
    %v933 = vld [vmem:[%s6 + $0x10] sm:$0xf]
    %v934 = vld [vmem:[%s6 + $0x14] sm:$0xf]
    %v935 = vld [vmem:[%s6 + $0x18] sm:$0xf]
    %v936 = vld [vmem:[%s6 + $0x1c] sm:$0xf]
    %v938 = vlaneseq
    %v939 = vshrl.u32 %v938, 7
    %v940 = vsub.s32 0, %v939
    %v941 = vrot.slane %v41, %v940
    %v951 = vunpack.c.l.b16 %v929
    %v952 = vunpack.c.l.b16 %v930
    %v953 = vunpack.c.l.b16 %v931
    %v954 = vunpack.c.l.b16 %v932
    %v955 = vunpack.c.l.b16 %v933
    %v956 = vunpack.c.l.b16 %v934
    %v957 = vunpack.c.l.b16 %v935
    %v958 = vunpack.c.l.b16 %v936
    %v959 = vpack.c.b16 %v952, %v951
    %v960 = vpack.c.b16 %v954, %v953
    %v961 = vpack.c.b16 %v956, %v955
    %v962 = vpack.c.b16 %v958, %v957
    %v968 = vsel %vm671, %v928, 0
    %970 = vmatprep.subr.bf16.mxu0 0
    %971 = vmatpush1.bf16.msra.mxu0 %v959
    %972 = vmatprep.subr.bf16.mxu0 0
    %973 = vmatpush1.bf16.msra.mxu0 %v960
    %974 = vmatprep.subr.bf16.mxu0 0
    %975 = vmatpush1.bf16.msra.mxu0 %v961
    %976 = vmatprep.subr.bf16.mxu0 0
    %977 = vmatpush1.bf16.msra.mxu0 %v962
    %978 = vmatprep.subr.bf16.mxu0 0
    %979 = vmatpush1.bf16.msra.mxu0 0
    %980 = vmatprep.subr.bf16.mxu0 0
    %981 = vmatpush1.bf16.msra.mxu0 0
    %982 = vmatprep.subr.bf16.mxu0 0
    %983 = vmatpush1.bf16.msra.mxu0 0
    %984 = vmatprep.subr.bf16.mxu0 0
    %985 = vmatpush1.bf16.msra.mxu0 0
    %986 = vmatprep.subr.bf16.mxu0 0
    %987 = vmatpush1.bf16.msra.mxu0 0
    %988 = vmatprep.subr.bf16.mxu0 0
    %989 = vmatpush1.bf16.msra.mxu0 0
    %990 = vmatprep.subr.bf16.mxu0 0
    %991 = vmatpush1.bf16.msra.mxu0 0
    %992 = vmatprep.subr.bf16.mxu0 0
    %993 = vmatpush1.bf16.msra.mxu0 0
    %994 = vmatprep.subr.bf16.mxu0 0
    %995 = vmatpush1.bf16.msra.mxu0 0
    %996 = vmatprep.subr.bf16.mxu0 0
    %997 = vmatpush1.bf16.msra.mxu0 0
    %998 = vmatprep.subr.bf16.mxu0 0
    %999 = vmatpush1.bf16.msra.mxu0 0
    %1000 = vmatprep.subr.bf16.mxu0 0
    %1001 = vmatpush1.bf16.msra.mxu0 0
    %1002 = vmatprep.mubr.bf16.mxu0 0
    %1003 = vmatmul.mubr.bf16.gmra.mrb[0].mxu0 %v968
    %v1004 = vpop.f32.mrb[0].mxu0
    %v1005 = vadd.f32 %v941, %v1004
    %v1006 = vpop.f32.mrb[0].mxu0
    %v1007 = vpop.f32.mrb[0].mxu0
    %v1008 = vadd.f32 %v941, %v1007
    %v1009 = vpop.f32.mrb[0].mxu0
    %1010 = vdwg.mxu0
    %v1011 = vmax.f32 %v1005, 0.0
    %v1012 = vmax.f32 %v1008, 0.0
    %v1013 = vpack.c.bf16 %v1012, %v1011
    %v1014 = vld [vmem:[%s7] sm:$0xff]
    %v1015 = vld [vmem:[%s7 + $0x8] sm:$0xff]
    %v1016 = vld [vmem:[%s7 + $0x10] sm:$0xff]
    %v1017 = vld [vmem:[%s7 + $0x18] sm:$0xf]
    %v1018 = vld [vmem:[%s7 + $0x1c] sm:$0xff]
    %v1019 = vld [vmem:[%s7 + $0x24] sm:$0xff]
    %v1020 = vld [vmem:[%s7 + $0x2c] sm:$0xff]
    %v1021 = vld [vmem:[%s7 + $0x34] sm:$0xf]
    %v1022 = vld [vmem:[%s7 + $0x38] sm:$0xff]
    %v1023 = vld [vmem:[%s7 + $0x40] sm:$0xff]
    %v1024 = vld [vmem:[%s7 + $0x48] sm:$0xff]
    %v1025 = vld [vmem:[%s7 + $0x50] sm:$0xf]
    %v1026 = vld [vmem:[%s7 + $0x54] sm:$0xff]
    %v1027 = vld [vmem:[%s7 + $0x5c] sm:$0xff]
    %v1028 = vld [vmem:[%s7 + $0x64] sm:$0xff]
    %v1029 = vld [vmem:[%s7 + $0x6c] sm:$0xf]
    %v1030 = vld [vmem:[%s7 + $0x70] sm:$0xff]
    %v1031 = vld [vmem:[%s7 + $0x78] sm:$0xff]
    %v1032 = vld [vmem:[%s7 + $0x80] sm:$0xff]
    %v1033 = vld [vmem:[%s7 + $0x88] sm:$0xf]
    %v1034 = vld [vmem:[%s7 + $0x8c] sm:$0xff]
    %v1035 = vld [vmem:[%s7 + $0x94] sm:$0xff]
    %v1036 = vld [vmem:[%s7 + $0x9c] sm:$0xff]
    %v1037 = vld [vmem:[%s7 + $0xa4] sm:$0xf]
    %v1038 = vld [vmem:[%s7 + $0xa8] sm:$0xff]
    %v1039 = vld [vmem:[%s7 + $0xb0] sm:$0xff]
    %v1040 = vld [vmem:[%s7 + $0xb8] sm:$0xff]
    %v1041 = vld [vmem:[%s7 + $0xc0] sm:$0xf]
    %v1042 = vld [vmem:[%s7 + $0xc4] sm:$0xff]
    %v1043 = vld [vmem:[%s7 + $0xcc] sm:$0xff]
    %v1044 = vld [vmem:[%s7 + $0xd4] sm:$0xff]
    %v1045 = vld [vmem:[%s7 + $0xdc] sm:$0xf]
    %v1047 = vlaneseq
    %v1048 = vshrl.u32 %v1047, 7
    %v1049 = vsub.s32 0, %v1048
    %v1050 = vrot.slane %v42, %v1049
    %v1051 = vlaneseq
    %v1052 = vshrl.u32 %v1051, 7
    %v1053 = vsub.s32 1, %v1052
    %v1054 = vrot.slane %v42, %v1053
    %v1055 = vlaneseq
    %v1056 = vshrl.u32 %v1055, 7
    %v1057 = vsub.s32 2, %v1056
    %v1058 = vrot.slane %v42, %v1057
    %v1059 = vlaneseq
    %v1060 = vshrl.u32 %v1059, 7
    %v1061 = vsub.s32 3, %v1060
    %v1062 = vrot.slane %v42, %v1061
    %v1063 = vlaneseq
    %v1064 = vshrl.u32 %v1063, 7
    %v1065 = vsub.s32 4, %v1064
    %v1066 = vrot.slane %v42, %v1065
    %v1067 = vlaneseq
    %v1068 = vshrl.u32 %v1067, 7
    %v1069 = vsub.s32 5, %v1068
    %v1070 = vrot.slane %v42, %v1069
    %v1071 = vlaneseq
    %v1072 = vshrl.u32 %v1071, 7
    %v1073 = vsub.s32 6, %v1072
    %v1074 = vrot.slane %v42, %v1073
    %v1114 = vunpack.c.l.b16 %v1014
    %v1115 = vunpack.c.h.b16 %v1014
    %v1116 = vunpack.c.l.b16 %v1015
    %v1117 = vunpack.c.h.b16 %v1015
    %v1118 = vunpack.c.l.b16 %v1016
    %v1119 = vunpack.c.h.b16 %v1016
    %v1120 = vunpack.c.l.b16 %v1017
    %v1121 = vunpack.c.l.b16 %v1018
    %v1122 = vunpack.c.h.b16 %v1018
    %v1123 = vunpack.c.l.b16 %v1019
    %v1124 = vunpack.c.h.b16 %v1019
    %v1125 = vunpack.c.l.b16 %v1020
    %v1126 = vunpack.c.h.b16 %v1020
    %v1127 = vunpack.c.l.b16 %v1021
    %v1128 = vunpack.c.l.b16 %v1022
    %v1129 = vunpack.c.h.b16 %v1022
    %v1130 = vunpack.c.l.b16 %v1023
    %v1131 = vunpack.c.h.b16 %v1023
    %v1132 = vunpack.c.l.b16 %v1024
    %v1133 = vunpack.c.h.b16 %v1024
    %v1134 = vunpack.c.l.b16 %v1025
    %v1135 = vunpack.c.l.b16 %v1026
    %v1136 = vunpack.c.h.b16 %v1026
    %v1137 = vunpack.c.l.b16 %v1027
    %v1138 = vunpack.c.h.b16 %v1027
    %v1139 = vunpack.c.l.b16 %v1028
    %v1140 = vunpack.c.h.b16 %v1028
    %v1141 = vunpack.c.l.b16 %v1029
    %v1142 = vunpack.c.l.b16 %v1030
    %v1143 = vunpack.c.h.b16 %v1030
    %v1144 = vunpack.c.l.b16 %v1031
    %v1145 = vunpack.c.h.b16 %v1031
    %v1146 = vunpack.c.l.b16 %v1032
    %v1147 = vunpack.c.h.b16 %v1032
    %v1148 = vunpack.c.l.b16 %v1033
    %v1149 = vunpack.c.l.b16 %v1034
    %v1150 = vunpack.c.h.b16 %v1034
    %v1151 = vunpack.c.l.b16 %v1035
    %v1152 = vunpack.c.h.b16 %v1035
    %v1153 = vunpack.c.l.b16 %v1036
    %v1154 = vunpack.c.h.b16 %v1036
    %v1155 = vunpack.c.l.b16 %v1037
    %v1156 = vunpack.c.l.b16 %v1038
    %v1157 = vunpack.c.h.b16 %v1038
    %v1158 = vunpack.c.l.b16 %v1039
    %v1159 = vunpack.c.h.b16 %v1039
    %v1160 = vunpack.c.l.b16 %v1040
    %v1161 = vunpack.c.h.b16 %v1040
    %v1162 = vunpack.c.l.b16 %v1041
    %v1163 = vunpack.c.l.b16 %v1042
    %v1164 = vunpack.c.h.b16 %v1042
    %v1165 = vunpack.c.l.b16 %v1043
    %v1166 = vunpack.c.h.b16 %v1043
    %v1167 = vunpack.c.l.b16 %v1044
    %v1168 = vunpack.c.h.b16 %v1044
    %v1169 = vunpack.c.l.b16 %v1045
    %v1170 = vpack.c.b16 %v1121, %v1114
    %v1171 = vpack.c.b16 %v1122, %v1115
    %v1172 = vpack.c.b16 %v1123, %v1116
    %v1173 = vpack.c.b16 %v1124, %v1117
    %v1174 = vpack.c.b16 %v1125, %v1118
    %v1175 = vpack.c.b16 %v1126, %v1119
    %v1176 = vpack.c.b16 %v1127, %v1120
    %v1177 = vpack.c.b16 %v1135, %v1128
    %v1178 = vpack.c.b16 %v1136, %v1129
    %v1179 = vpack.c.b16 %v1137, %v1130
    %v1180 = vpack.c.b16 %v1138, %v1131
    %v1181 = vpack.c.b16 %v1139, %v1132
    %v1182 = vpack.c.b16 %v1140, %v1133
    %v1183 = vpack.c.b16 %v1141, %v1134
    %v1184 = vpack.c.b16 %v1149, %v1142
    %v1185 = vpack.c.b16 %v1150, %v1143
    %v1186 = vpack.c.b16 %v1151, %v1144
    %v1187 = vpack.c.b16 %v1152, %v1145
    %v1188 = vpack.c.b16 %v1153, %v1146
    %v1189 = vpack.c.b16 %v1154, %v1147
    %v1190 = vpack.c.b16 %v1155, %v1148
    %v1191 = vpack.c.b16 %v1163, %v1156
    %v1192 = vpack.c.b16 %v1164, %v1157
    %v1193 = vpack.c.b16 %v1165, %v1158
    %v1194 = vpack.c.b16 %v1166, %v1159
    %v1195 = vpack.c.b16 %v1167, %v1160
    %v1196 = vpack.c.b16 %v1168, %v1161
    %v1197 = vpack.c.b16 %v1169, %v1162
    %v1227 = vsel %vm671, %v1013, 0
    %1229 = vmatprep.subr.bf16.mxu0 %v1171
    %1230 = vmatpush1.bf16.msra.mxu0 %v1170
    %1231 = vmatprep.subr.bf16.mxu0 %v1178
    %1232 = vmatpush1.bf16.msra.mxu0 %v1177
    %1233 = vmatprep.subr.bf16.mxu0 %v1185
    %1234 = vmatpush1.bf16.msra.mxu0 %v1184
    %1235 = vmatprep.subr.bf16.mxu0 %v1192
    %1236 = vmatpush1.bf16.msra.mxu0 %v1191
    %1237 = vmatprep.subr.bf16.mxu0 0
    %1238 = vmatpush1.bf16.msra.mxu0 0
    %1239 = vmatprep.subr.bf16.mxu0 0
    %1240 = vmatpush1.bf16.msra.mxu0 0
    %1241 = vmatprep.subr.bf16.mxu0 0
    %1242 = vmatpush1.bf16.msra.mxu0 0
    %1243 = vmatprep.subr.bf16.mxu0 0
    %1244 = vmatpush1.bf16.msra.mxu0 0
    %1245 = vmatprep.subr.bf16.mxu0 0
    %1246 = vmatpush1.bf16.msra.mxu0 0
    %1247 = vmatprep.subr.bf16.mxu0 0
    %1248 = vmatpush1.bf16.msra.mxu0 0
    %1249 = vmatprep.subr.bf16.mxu0 0
    %1250 = vmatpush1.bf16.msra.mxu0 0
    %1251 = vmatprep.subr.bf16.mxu0 0
    %1252 = vmatpush1.bf16.msra.mxu0 0
    %1253 = vmatprep.subr.bf16.mxu0 0
    %1254 = vmatpush1.bf16.msra.mxu0 0
    %1255 = vmatprep.subr.bf16.mxu0 0
    %1256 = vmatpush1.bf16.msra.mxu0 0
    %1257 = vmatprep.subr.bf16.mxu0 0
    %1258 = vmatpush1.bf16.msra.mxu0 0
    %1259 = vmatprep.subr.bf16.mxu0 0
    %1260 = vmatpush1.bf16.msra.mxu0 0
    %1261 = vmatprep.mubr.bf16.mxu0 0
    %1262 = vmatmul.mubr.bf16.gmra.mrb[0].mxu0 %v1227
    %v1263 = vpop.f32.mrb[0].mxu0
    %v1264 = vadd.f32 %v1050, %v1263
    %v1265 = vpop.f32.mrb[0].mxu0
    %v1266 = vadd.f32 %v1054, %v1265
    %v1267 = vpop.f32.mrb[0].mxu0
    %v1268 = vadd.f32 %v1050, %v1267
    %v1269 = vpop.f32.mrb[0].mxu0
    %v1270 = vadd.f32 %v1054, %v1269
    %1271 = vdwg.mxu0
    %1272 = vmatprep.subr.bf16.mxu0 %v1173
    %1273 = vmatpush1.bf16.msra.mxu0 %v1172
    %1274 = vmatprep.subr.bf16.mxu0 %v1180
    %1275 = vmatpush1.bf16.msra.mxu0 %v1179
    %1276 = vmatprep.subr.bf16.mxu0 %v1187
    %1277 = vmatpush1.bf16.msra.mxu0 %v1186
    %1278 = vmatprep.subr.bf16.mxu0 %v1194
    %1279 = vmatpush1.bf16.msra.mxu0 %v1193
    %1280 = vmatprep.subr.bf16.mxu0 0
    %1281 = vmatpush1.bf16.msra.mxu0 0
    %1282 = vmatprep.subr.bf16.mxu0 0
    %1283 = vmatpush1.bf16.msra.mxu0 0
    %1284 = vmatprep.subr.bf16.mxu0 0
    %1285 = vmatpush1.bf16.msra.mxu0 0
    %1286 = vmatprep.subr.bf16.mxu0 0
    %1287 = vmatpush1.bf16.msra.mxu0 0
    %1288 = vmatprep.subr.bf16.mxu0 0
    %1289 = vmatpush1.bf16.msra.mxu0 0
    %1290 = vmatprep.subr.bf16.mxu0 0
    %1291 = vmatpush1.bf16.msra.mxu0 0
    %1292 = vmatprep.subr.bf16.mxu0 0
    %1293 = vmatpush1.bf16.msra.mxu0 0
    %1294 = vmatprep.subr.bf16.mxu0 0
    %1295 = vmatpush1.bf16.msra.mxu0 0
    %1296 = vmatprep.subr.bf16.mxu0 0
    %1297 = vmatpush1.bf16.msra.mxu0 0
    %1298 = vmatprep.subr.bf16.mxu0 0
    %1299 = vmatpush1.bf16.msra.mxu0 0
    %1300 = vmatprep.subr.bf16.mxu0 0
    %1301 = vmatpush1.bf16.msra.mxu0 0
    %1302 = vmatprep.subr.bf16.mxu0 0
    %1303 = vmatpush1.bf16.msra.mxu0 0
    %1304 = vmatprep.mubr.bf16.mxu0 0
    %1305 = vmatmul.mubr.bf16.gmra.mrb[0].mxu0 %v1227
    %v1306 = vpop.f32.mrb[0].mxu0
    %v1307 = vadd.f32 %v1058, %v1306
    %v1308 = vpop.f32.mrb[0].mxu0
    %v1309 = vadd.f32 %v1062, %v1308
    %v1310 = vpop.f32.mrb[0].mxu0
    %v1311 = vadd.f32 %v1058, %v1310
    %v1312 = vpop.f32.mrb[0].mxu0
    %v1313 = vadd.f32 %v1062, %v1312
    %1314 = vdwg.mxu0
    %1315 = vmatprep.subr.bf16.mxu0 %v1175
    %1316 = vmatpush1.bf16.msra.mxu0 %v1174
    %1317 = vmatprep.subr.bf16.mxu0 %v1182
    %1318 = vmatpush1.bf16.msra.mxu0 %v1181
    %1319 = vmatprep.subr.bf16.mxu0 %v1189
    %1320 = vmatpush1.bf16.msra.mxu0 %v1188
    %1321 = vmatprep.subr.bf16.mxu0 %v1196
    %1322 = vmatpush1.bf16.msra.mxu0 %v1195
    %1323 = vmatprep.subr.bf16.mxu0 0
    %1324 = vmatpush1.bf16.msra.mxu0 0
    %1325 = vmatprep.subr.bf16.mxu0 0
    %1326 = vmatpush1.bf16.msra.mxu0 0
    %1327 = vmatprep.subr.bf16.mxu0 0
    %1328 = vmatpush1.bf16.msra.mxu0 0
    %1329 = vmatprep.subr.bf16.mxu0 0
    %1330 = vmatpush1.bf16.msra.mxu0 0
    %1331 = vmatprep.subr.bf16.mxu0 0
    %1332 = vmatpush1.bf16.msra.mxu0 0
    %1333 = vmatprep.subr.bf16.mxu0 0
    %1334 = vmatpush1.bf16.msra.mxu0 0
    %1335 = vmatprep.subr.bf16.mxu0 0
    %1336 = vmatpush1.bf16.msra.mxu0 0
    %1337 = vmatprep.subr.bf16.mxu0 0
    %1338 = vmatpush1.bf16.msra.mxu0 0
    %1339 = vmatprep.subr.bf16.mxu0 0
    %1340 = vmatpush1.bf16.msra.mxu0 0
    %1341 = vmatprep.subr.bf16.mxu0 0
    %1342 = vmatpush1.bf16.msra.mxu0 0
    %1343 = vmatprep.subr.bf16.mxu0 0
    %1344 = vmatpush1.bf16.msra.mxu0 0
    %1345 = vmatprep.subr.bf16.mxu0 0
    %1346 = vmatpush1.bf16.msra.mxu0 0
    %1347 = vmatprep.mubr.bf16.mxu0 0
    %1348 = vmatmul.mubr.bf16.gmra.mrb[0].mxu0 %v1227
    %v1349 = vpop.f32.mrb[0].mxu0
    %v1350 = vadd.f32 %v1066, %v1349
    %v1351 = vpop.f32.mrb[0].mxu0
    %v1352 = vadd.f32 %v1070, %v1351
    %v1353 = vpop.f32.mrb[0].mxu0
    %v1354 = vadd.f32 %v1066, %v1353
    %v1355 = vpop.f32.mrb[0].mxu0
    %v1356 = vadd.f32 %v1070, %v1355
    %1357 = vdwg.mxu0
    %1358 = vmatprep.subr.bf16.mxu0 0
    %1359 = vmatpush1.bf16.msra.mxu0 %v1176
    %1360 = vmatprep.subr.bf16.mxu0 0
    %1361 = vmatpush1.bf16.msra.mxu0 %v1183
    %1362 = vmatprep.subr.bf16.mxu0 0
    %1363 = vmatpush1.bf16.msra.mxu0 %v1190
    %1364 = vmatprep.subr.bf16.mxu0 0
    %1365 = vmatpush1.bf16.msra.mxu0 %v1197
    %1366 = vmatprep.subr.bf16.mxu0 0
    %1367 = vmatpush1.bf16.msra.mxu0 0
    %1368 = vmatprep.subr.bf16.mxu0 0
    %1369 = vmatpush1.bf16.msra.mxu0 0
    %1370 = vmatprep.subr.bf16.mxu0 0
    %1371 = vmatpush1.bf16.msra.mxu0 0
    %1372 = vmatprep.subr.bf16.mxu0 0
    %1373 = vmatpush1.bf16.msra.mxu0 0
    %1374 = vmatprep.subr.bf16.mxu0 0
    %1375 = vmatpush1.bf16.msra.mxu0 0
    %1376 = vmatprep.subr.bf16.mxu0 0
    %1377 = vmatpush1.bf16.msra.mxu0 0
    %1378 = vmatprep.subr.bf16.mxu0 0
    %1379 = vmatpush1.bf16.msra.mxu0 0
    %1380 = vmatprep.subr.bf16.mxu0 0
    %1381 = vmatpush1.bf16.msra.mxu0 0
    %1382 = vmatprep.subr.bf16.mxu0 0
    %1383 = vmatpush1.bf16.msra.mxu0 0
    %1384 = vmatprep.subr.bf16.mxu0 0
    %1385 = vmatpush1.bf16.msra.mxu0 0
    %1386 = vmatprep.subr.bf16.mxu0 0
    %1387 = vmatpush1.bf16.msra.mxu0 0
    %1388 = vmatprep.subr.bf16.mxu0 0
    %1389 = vmatpush1.bf16.msra.mxu0 0
    %1390 = vmatprep.mubr.bf16.mxu0 0
    %1391 = vmatmul.mubr.bf16.gmra.mrb[0].mxu0 %v1227
    %v1392 = vpop.f32.mrb[0].mxu0
    %v1393 = vadd.f32 %v1074, %v1392
    %v1394 = vpop.f32.mrb[0].mxu0
    %v1395 = vpop.f32.mrb[0].mxu0
    %v1396 = vadd.f32 %v1074, %v1395
    %v1397 = vpop.f32.mrb[0].mxu0
    %1398 = vdwg.mxu0
    %v1399 = vxor.u32 %v1264, 2147483648
    %v1400 = vxor.u32 %v1266, 2147483648
    %v1401 = vxor.u32 %v1307, 2147483648
    %v1402 = vxor.u32 %v1309, 2147483648
    %v1403 = vxor.u32 %v1350, 2147483648
    %v1404 = vxor.u32 %v1352, 2147483648
    %v1405 = vxor.u32 %v1393, 2147483648
    %v1406 = vxor.u32 %v1268, 2147483648
    %v1407 = vxor.u32 %v1270, 2147483648
    %v1408 = vxor.u32 %v1311, 2147483648
    %v1409 = vxor.u32 %v1313, 2147483648
    %v1410 = vxor.u32 %v1354, 2147483648
    %v1411 = vxor.u32 %v1356, 2147483648
    %v1412 = vxor.u32 %v1396, 2147483648
    %v1413 = vmul.f32 %v1399, 1.442695
    %v1414 = vpow.pop %v1413
    %v1415 = vmul.f32 %v1400, 1.442695
    %v1416 = vpow.pop %v1415
    %v1417 = vmul.f32 %v1401, 1.442695
    %v1418 = vpow.pop %v1417
    %v1419 = vmul.f32 %v1402, 1.442695
    %v1420 = vpow.pop %v1419
    %v1421 = vmul.f32 %v1403, 1.442695
    %v1422 = vpow.pop %v1421
    %v1423 = vmul.f32 %v1404, 1.442695
    %v1424 = vpow.pop %v1423
    %v1425 = vmul.f32 %v1405, 1.442695
    %v1426 = vpow.pop %v1425
    %v1427 = vmul.f32 %v1406, 1.442695
    %v1428 = vpow.pop %v1427
    %v1429 = vmul.f32 %v1407, 1.442695
    %v1430 = vpow.pop %v1429
    %v1431 = vmul.f32 %v1408, 1.442695
    %v1432 = vpow.pop %v1431
    %v1433 = vmul.f32 %v1409, 1.442695
    %v1434 = vpow.pop %v1433
    %v1435 = vmul.f32 %v1410, 1.442695
    %v1436 = vpow.pop %v1435
    %v1437 = vmul.f32 %v1411, 1.442695
    %v1438 = vpow.pop %v1437
    %v1439 = vmul.f32 %v1412, 1.442695
    %v1440 = vpow.pop %v1439
    %v1441 = vadd.f32 %v1414, 1.0
    %v1442 = vadd.f32 %v1416, 1.0
    %v1443 = vadd.f32 %v1418, 1.0
    %v1444 = vadd.f32 %v1420, 1.0
    %v1445 = vadd.f32 %v1422, 1.0
    %v1446 = vadd.f32 %v1424, 1.0
    %v1447 = vadd.f32 %v1426, 1.0
    %v1448 = vadd.f32 %v1428, 1.0
    %v1449 = vadd.f32 %v1430, 1.0
    %v1450 = vadd.f32 %v1432, 1.0
    %v1451 = vadd.f32 %v1434, 1.0
    %v1452 = vadd.f32 %v1436, 1.0
    %v1453 = vadd.f32 %v1438, 1.0
    %v1454 = vadd.f32 %v1440, 1.0
    %v1455 = vrcp.pop %v1441
    %v1456 = vmul.f32 1.0, %v1455
    %v1457 = vrcp.pop %v1442
    %v1458 = vmul.f32 1.0, %v1457
    %v1459 = vrcp.pop %v1443
    %v1460 = vmul.f32 1.0, %v1459
    %v1461 = vrcp.pop %v1444
    %v1462 = vmul.f32 1.0, %v1461
    %v1463 = vrcp.pop %v1445
    %v1464 = vmul.f32 1.0, %v1463
    %v1465 = vrcp.pop %v1446
    %v1466 = vmul.f32 1.0, %v1465
    %v1467 = vrcp.pop %v1447
    %v1468 = vmul.f32 1.0, %v1467
    %v1469 = vrcp.pop %v1448
    %v1470 = vmul.f32 1.0, %v1469
    %v1471 = vrcp.pop %v1449
    %v1472 = vmul.f32 1.0, %v1471
    %v1473 = vrcp.pop %v1450
    %v1474 = vmul.f32 1.0, %v1473
    %v1475 = vrcp.pop %v1451
    %v1476 = vmul.f32 1.0, %v1475
    %v1477 = vrcp.pop %v1452
    %v1478 = vmul.f32 1.0, %v1477
    %v1479 = vrcp.pop %v1453
    %v1480 = vmul.f32 1.0, %v1479
    %v1481 = vrcp.pop %v1454
    %v1482 = vmul.f32 1.0, %v1481
    %1483 = vst [vmem:[#allocation2] sm:$0xff] %v1456
    %1484 = vst [vmem:[#allocation2 + $0x8] sm:$0xff] %v1458
    %1485 = vst [vmem:[#allocation2 + $0x10] sm:$0xff] %v1460
    %1486 = vst [vmem:[#allocation2 + $0x18] sm:$0xff] %v1462
    %1487 = vst [vmem:[#allocation2 + $0x20] sm:$0xff] %v1464
    %1488 = vst [vmem:[#allocation2 + $0x28] sm:$0xff] %v1466
    %1489 = vst [vmem:[#allocation2 + $0x30] sm:$0xff] %v1468
    %1490 = vst [vmem:[#allocation2 + $0x38] sm:$0xff] %v1470
    %1491 = vst [vmem:[#allocation2 + $0x40] sm:$0xff] %v1472
    %1492 = vst [vmem:[#allocation2 + $0x48] sm:$0xff] %v1474
    %1493 = vst [vmem:[#allocation2 + $0x50] sm:$0xff] %v1476
    %1494 = vst [vmem:[#allocation2 + $0x58] sm:$0xff] %v1478
    %1495 = vst [vmem:[#allocation2 + $0x60] sm:$0xff] %v1480
    %1496 = vst [vmem:[#allocation2 + $0x68] sm:$0xff] %v1482
    // Predicated region
    $region38: #{tpu_custom_call.1} parent=1 // pred_check
      _
    $region39: #{tpu_custom_call.1} parent=1 // pred_check_branch
      %1498 = sbr.rel (0) target = $region41
    $region40: #{tpu_custom_call.1} parent=1 // pred_region
      %s1500 = ssub.s32 1792, 1792
      %1501 = vsyncadd [#allocation3], %s1500
      %s1502 = sshll.u32 [#allocation2], 4
      %s1503 = int_to_ptr.vmem [resolvable:$true] %s1502
      %1508 = dma.vmem_to_hbm [thread:$0]  %s1503, 1792, %s9, [#allocation3], 896, 896, 56
    $region41: #{tpu_custom_call.1} parent=1 // pred_fallthru
      _
    // Predicated region
    $region42: #{tpu_custom_call.1} parent=1 // pred_check
      _
    $region43: #{tpu_custom_call.1} parent=1 // pred_check_branch
      %1510 = sbr.rel (0) target = $region45
    $region44: #{tpu_custom_call.1} parent=1 // pred_region
      %s1512 = ssub.s32 256, 256
      %1513 = vsyncadd [#allocation5], %s1512
      %s1514 = sshll.u32 [#allocation4], 4
      %s1515 = int_to_ptr.vmem [resolvable:$true] %s1514
      %1520 = dma.vmem_to_hbm [thread:$0]  %s1515, 256, %s10, [#allocation5], 128, 128, 8
    $region45: #{tpu_custom_call.1} parent=1 // pred_fallthru
      _
    // Predicated region
    $region46: #{tpu_custom_call.1} parent=1 // pred_check
      _
    $region47: #{tpu_custom_call.1} parent=1 // pred_check_branch
      %1522 = sbr.rel (0) target = $region49
    $region48: #{tpu_custom_call.1} parent=1 // pred_region
      %1523 = dma.done [#allocation3], 1792
    $region49: #{tpu_custom_call.1} parent=1 // pred_fallthru
      _
    // Predicated region
    $region50: #{tpu_custom_call.1} parent=1 // pred_check
      _
    $region51: #{tpu_custom_call.1} parent=1 // pred_check_branch
      %1525 = sbr.rel (0) target = $region53
    $region52: #{tpu_custom_call.1} parent=1 // pred_region
      %1526 = dma.done [#allocation5], 256
    $region53: #{tpu_custom_call.1} parent=1 // pred_fallthru
      _
    %1527 = vsyncpa [#allocation3], 1
    %1528 = vsyncpa [#allocation5], 1

</llo_original>
